<compile_context>
chip_gen: v7x
topology: tpu7x:2x2x1
jax: 0.10.0
libtpu: 0.0.40
codegen_flags: <defaults>
</compile_context>

<pallas_src>
import math
import functools

import jax
import jax.numpy as jnp
from jax.experimental import pallas as pl
from jax.experimental.pallas import tpu as pltpu

_LANE = 128


def _round_up(x, m):
    return ((x + m - 1) // m) * m


def _self_attn_kernel(q_in_ref, x_in_ref, mask_ref,
                      wq_ref, bq_ref, wk_ref, bk_ref, wv_ref, bv_ref,
                      wo_ref, bo_ref, wout_ref, bout_ref,
                      out_ref, attn_ref, *, num_heads, dk_pad, exp_dtype):
    f32 = jnp.float32
    bf16 = jnp.bfloat16
    TB, S, D = q_in_ref.shape
    O_pad = out_ref.shape[-1]
    Sk_pad = attn_ref.shape[-1]
    H = num_heads
    M = TB * S

    # Fold the batch tile into the matmul M dimension (TB*S rows on the MXU).
    q_in = q_in_ref[...].reshape(M, D).astype(bf16)
    x_in = x_in_ref[...].reshape(M, D).astype(bf16)

    # Q/K/V projections: bf16 operands, f32 accumulation.  Weights are (D_in, D_out),
    # head-padded to dk_pad columns per head and pre-cast to bf16 on the host;
    # 1/sqrt(d_k) is folded into Wq/bq, so there is no in-kernel scale multiply.
    q = jnp.dot(q_in, wq_ref[...], preferred_element_type=f32) + bq_ref[...]
    k = jnp.dot(x_in, wk_ref[...], preferred_element_type=f32) + bk_ref[...]
    v = jnp.dot(x_in, wv_ref[...], preferred_element_type=f32) + bv_ref[...]

    q3 = q.astype(bf16).reshape(TB, S, H * dk_pad)
    k3 = k.astype(bf16).reshape(TB, S, H * dk_pad)
    v3 = v.astype(bf16).reshape(TB, S, H * dk_pad)

    # Hoisted additive mask bias (one select per grid step, shared by all heads).
    # -1e30 instead of -inf: identical masked softmax for partially-masked rows and
    # NaN-free (uniform) for fully-masked rows where PyTorch would emit NaN.
    neg_bias = jnp.where(mask_ref[...] == 0.0, f32(-1e30), f32(0.0))     # (TB, 1, S)

    # Hoisted (constant) lane padding for the lane-dense attn store.
    pad_cols = Sk_pad - S
    if pad_cols:
        attn_pad = jnp.zeros((TB, S, pad_cols), bf16)

    feature = jnp.zeros((M, D), f32)          # f32 accumulator for the output projection
    for h in range(H):                        # static loop over heads
        sl = slice(h * dk_pad, (h + 1) * dk_pad)   # lane-tile-aligned -> no relayout copies
        qh, kh, vh = q3[:, :, sl], k3[:, :, sl], v3[:, :, sl]

        scores = jnp.einsum('bqd,bkd->bqk', qh, kh,
                            preferred_element_type=f32)                  # (TB, S, S) f32
        scores = scores + neg_bias                                       # broadcast over q rows
        m = jnp.max(scores, axis=-1, keepdims=True)
        e = jnp.exp((scores - m).astype(exp_dtype))    # bf16 exp on v6e/v7x EUP, f32 on v5e
        denom = jnp.sum(e.astype(f32), axis=-1, keepdims=True)
        inv = 1.0 / denom                              # exact: probs are a visible output
        p = (e * inv.astype(e.dtype)).astype(bf16)                       # (TB, S, S)
        # TODO(synk): nn.Dropout(p=0.1) on p is identity in eval mode; train-mode RNG
        # dropout is not implemented.

        # Per-head, lane-dense bf16 store of the attention probabilities (no stack).
        if pad_cols:
            attn_ref[:, h, :, :] = jnp.concatenate([p, attn_pad], axis=-1)
        else:
            attn_ref[:, h, :, :] = p

        ctx = jnp.einsum('bqk,bkd->bqd', p, vh,
                         preferred_element_type=f32)                     # (TB, S, dk_pad)
        # Accumulate the output projection per head (aligned sublane slice of Wo rows);
        # replaces the old lane-dim concat of all heads.
        feature = feature + jnp.dot(ctx.reshape(M, dk_pad).astype(bf16),
                                    wo_ref[sl, :], preferred_element_type=f32)

    feature = feature + bo_ref[...]
    out = jnp.dot(feature.astype(bf16), wout_ref[...],
                  preferred_element_type=f32) + bout_ref[...]
    out_ref[...] = out.reshape(TB, S, O_pad)                             # lane-dense store


def _pick_batch_tile(B, S, vmem_bytes_fn, vmem_budget, megacore):
    """Largest divisor TB of B that fits the VMEM budget and keeps TB*S near the
    MXU-friendly row target (256 on v7x so both TensorCores get a grid step, 512 on
    single-TC v5e/v6e), preferring 128-row-aligned tiles.  Batches are only fused when
    S is sublane-aligned so the in-kernel (TB,S,*)->(TB*S,*) reshapes are layout-clean."""
    if S % 8 != 0:
        return 1
    divisors = [t for t in range(1, B + 1) if B % t == 0]
    fits = [t for t in divisors if t == 1 or vmem_bytes_fn(t) <= vmem_budget]
    target_rows = 256 if megacore else 512
    cands = [t for t in fits if t * S <= target_rows] or [1]
    best = max(cands, key=lambda t: ((t * S) % 128 == 0, t))
    if megacore and B >= 2 and B // best < 2:          # keep >= 2 grid steps for 2 TCs
        two_step = [t for t in cands if B // t >= 2]
        best = max(two_step, key=lambda t: ((t * S) % 128 == 0, t)) if two_step else 1
    return best


def prepare_params(params, *, num_heads):
    """One-time host-side parameter prep (keep OUT of the per-call hot path):
       * weights (D_in, D_out), cast to bf16 once,
       * per-head Q/K/V columns (and Wo rows) zero-padded so each head occupies a
         lane-tile-aligned dk_pad = round_up(d_k, 128) block,
       * 1/sqrt(d_k) folded into Wq / bq,
       * out_layer padded to a lane-dense O_pad = round_up(O, 128) width."""
    f32, bf16 = jnp.float32, jnp.bfloat16
    D = params["wq"].shape[0]
    H = num_heads
    d_k = D // H
    dk_pad = _round_up(d_k, _LANE)
    O = params["w_out"].shape[1]
    O_pad = _round_up(O, _LANE)

    def pad_head_cols(w):       # (D, D) -> (D, H*dk_pad)
        w4 = jnp.pad(w.reshape(D, H, d_k), ((0, 0), (0, 0), (0, dk_pad - d_k)))
        return w4.reshape(D, H * dk_pad)

    def pad_head_bias(b):       # (1, D) -> (1, H*dk_pad)
        b3 = jnp.pad(b.reshape(1, H, d_k), ((0, 0), (0, 0), (0, dk_pad - d_k)))
        return b3.reshape(1, H * dk_pad)

    def pad_head_rows(w):       # (D, D) -> (H*dk_pad, D)   (output_linear)
        w4 = jnp.pad(w.reshape(H, d_k, D), ((0, 0), (0, dk_pad - d_k), (0, 0)))
        return w4.reshape(H * dk_pad, D)

    scale = 1.0 / math.sqrt(d_k)
    return dict(
        wq=(pad_head_cols(params["wq"]) * scale).astype(bf16),
        bq=(pad_head_bias(params["bq"]) * scale).astype(f32),
        wk=pad_head_cols(params["wk"]).astype(bf16),
        bk=pad_head_bias(params["bk"]).astype(f32),
        wv=pad_head_cols(params["wv"]).astype(bf16),
        bv=pad_head_bias(params["bv"]).astype(f32),
        wo=pad_head_rows(params["wo"]).astype(bf16),
        bo=params["bo"].astype(f32),
        w_out=jnp.pad(params["w_out"], ((0, 0), (0, O_pad - O))).astype(bf16),
        b_out=jnp.pad(params["b_out"], ((0, 0), (0, O_pad - O))).astype(f32),
        num_heads=H, d_k=d_k, dk_pad=dk_pad, out_size=O,
    )


def self_attention_feature_extract(inputs, query, mask, kparams):
    """Returns (out: (B*S, O) f32, attn: (B, H, S, S) bf16)."""
    B, S, D = query.shape
    H = kparams["num_heads"]
    dk_pad = kparams["dk_pad"]
    D_pad = H * dk_pad
    O = kparams["out_size"]
    O_pad = kparams["w_out"].shape[1]
    Sk_pad = _round_up(S, _LANE)              # lane-dense attn store (no-op if S%128==0)

    # ---- per-generation knobs -------------------------------------------------------
    try:
        kind = jax.devices()[0].device_kind.lower()
    except Exception:
        kind = ""
    megacore = "v7" in kind                                     # v7x: 2 TCs share the grid
    exp_dtype = jnp.bfloat16 if ("v6" in kind or "v7" in kind) else jnp.float32
    try:
        vmem_cap = int(pltpu.get_tpu_info().vmem_capacity_bytes)
    except Exception:
        vmem_cap = 64 << 20                                     # conservative (v7x per-TC)

    def vmem_bytes(tb):
        f4, f2 = 4, 2
        m = tb * S
        blocks = (2 * 2 * m * D * f4              # query + inputs, double-buffered
                  + 2 * tb * S * f4               # mask
                  + 2 * m * O_pad * f4            # out block, double-buffered
                  + 2 * tb * H * S * Sk_pad * f2)  # attn block (bf16), double-buffered
        weights = (3 * D * D_pad + D_pad * D + D * O_pad) * f2 + (3 * D_pad + D + O_pad) * f4
        temps = m * (D_pad * (3 * f4 + 3 * f2)    # q/k/v f32 + bf16 copies
                     + Sk_pad * (2 * f4 + f2)     # scores / exp / probs (one head live)
                     + dk_pad * f4                # ctx
                     + D * f4 + O_pad * f4)       # feature accumulator, out
        return weights + int(1.25 * (blocks + temps))

    TB = _pick_batch_tile(B, S, vmem_bytes, int(0.7 * vmem_cap), megacore)
    grid = (B // TB,)
    vmem_limit = int(min(0.92 * vmem_cap, max(1.5 * vmem_bytes(TB), 32 << 20)))

    mask3 = mask.reshape(B, 1, S).astype(jnp.float32)
    kernel = functools.partial(_self_attn_kernel, num_heads=H, dk_pad=dk_pad,
                               exp_dtype=exp_dtype)

    # Weights/biases never change across the batch grid: whole, single-buffered VMEM
    # residents (no pointless double-buffering of constant parameters).
    const_vmem = pl.BlockSpec(memory_space=pltpu.MemorySpace.VMEM)

    out, attn = pl.pallas_call(
        kernel,
        out_shape=(jax.ShapeDtypeStruct((B, S, O_pad), jnp.float32),
                   jax.ShapeDtypeStruct((B, H, S, Sk_pad), jnp.bfloat16)),
        grid=grid,
        in_specs=[
            pl.BlockSpec((TB, S, D), lambda b: (b, 0, 0)),    # query
            pl.BlockSpec((TB, S, D), lambda b: (b, 0, 0)),    # inputs (key == value source)
            pl.BlockSpec((TB, 1, S), lambda b: (b, 0, 0)),    # mask
            const_vmem, const_vmem,                           # Wq, bq
            const_vmem, const_vmem,                           # Wk, bk
            const_vmem, const_vmem,                           # Wv, bv
            const_vmem, const_vmem,                           # Wo (output_linear), bo
            const_vmem, const_vmem,                           # out_layer W, b
        ],
        out_specs=(
            pl.BlockSpec((TB, S, O_pad), lambda b: (b, 0, 0)),
            pl.BlockSpec((TB, H, S, Sk_pad), lambda b: (b, 0, 0, 0)),
        ),
        compiler_params=pltpu.CompilerParams(
            dimension_semantics=("parallel",),
            vmem_limit_bytes=vmem_limit),
    )(query, inputs, mask3,
      kparams["wq"], kparams["bq"], kparams["wk"], kparams["bk"],
      kparams["wv"], kparams["bv"], kparams["wo"], kparams["bo"],
      kparams["w_out"], kparams["b_out"])

    if O_pad != O:
        out = out[:, :, :O]
    if Sk_pad != S:
        attn = attn[..., :S]
    return out.reshape(B * S, O), attn


def init_params(key, d_model, output_size):
    """Deterministic PyTorch-style Linear init; weights stored as (D_in, D_out), f32."""
    keys = jax.random.split(key, 10)

    def linear(kw, kb, d_in, d_out):
        bound = 1.0 / math.sqrt(d_in)
        w = jax.random.uniform(kw, (d_in, d_out), jnp.float32, -bound, bound)
        b = jax.random.uniform(kb, (1, d_out), jnp.float32, -bound, bound)
        return w, b

    wq, bq = linear(keys[0], keys[1], d_model, d_model)
    wk, bk = linear(keys[2], keys[3], d_model, d_model)
    wv, bv = linear(keys[4], keys[5], d_model, d_model)
    wo, bo = linear(keys[6], keys[7], d_model, d_model)
    w_out, b_out = linear(keys[8], keys[9], d_model, output_size)
    return dict(wq=wq, bq=bq, wk=wk, bk=bk, wv=wv, bv=bv,
                wo=wo, bo=bo, w_out=w_out, b_out=b_out)


def reference(inputs, query, mask, params, num_heads):
    """Pure-JAX reference mirroring the PyTorch forward (f32 throughout)."""
    B, S, D = query.shape
    d_k = D // num_heads
    q = query @ params["wq"] + params["bq"]
    k = inputs @ params["wk"] + params["bk"]
    v = inputs @ params["wv"] + params["bv"]
    split = lambda x: x.reshape(B, S, num_heads, d_k).transpose(0, 2, 1, 3)
    qh, kh, vh = split(q), split(k), split(v)
    scores = jnp.einsum('bhqd,bhkd->bhqk', qh, kh) / math.sqrt(d_k)
    scores = jnp.where(mask.reshape(B, 1, 1, S) == 0, -jnp.inf, scores)
    p = jax.nn.softmax(scores, axis=-1)
    x = jnp.einsum('bhqk,bhkd->bhqd', p, vh).transpose(0, 2, 1, 3).reshape(B, S, D)
    feat = x @ params["wo"] + params["bo"]
    out = (feat @ params["w_out"] + params["b_out"]).reshape(B * S, -1)
    return out, p


if __name__ == "__main__":
    B, S, D, H, O = 2, 8, 32, 4, 16   # batch, seq, input_size (d_model), heads, output_size

    key = jax.random.PRNGKey(0)
    k_in, k_q, k_p = jax.random.split(key, 3)
    inputs = jax.random.normal(k_in, (B, S, D), jnp.float32)
    query = jax.random.normal(k_q, (B, S, D), jnp.float32)
    mask = jnp.ones((B, S), jnp.float32).at[0, -2:].set(0.0)   # mask 2 key positions in batch 0
    params = init_params(k_p, D, O)
    kparams = prepare_params(params, num_heads=H)              # one-time bf16 cast / pad / fold

    out, attn = self_attention_feature_extract(inputs, query, mask, kparams)
    jax.block_until_ready((out, attn))

    out_exp, attn_exp = reference(inputs, query, mask, params, H)
    assert out.shape == (B * S, O) and attn.shape == (B, H, S, S)
    assert jnp.allclose(out, out_exp, rtol=2e-2, atol=2e-2)
    assert jnp.allclose(attn.astype(jnp.float32), attn_exp, rtol=2e-2, atol=2e-2)

    print("KERNEL_OK")
</pallas_src>

<mosaic_0001>
module attributes {stable_mosaic.version = 11 : i64} {
  func.func @_self_attn_kernel(%arg0: i32, %arg1: memref<2x8x32xf32, #tpu.memory_space<vmem>>, %arg2: memref<2x8x32xf32, #tpu.memory_space<vmem>>, %arg3: memref<2x1x8xf32, #tpu.memory_space<vmem>>, %arg4: memref<32x512xbf16, #tpu.memory_space<vmem>>, %arg5: memref<1x512xf32, #tpu.memory_space<vmem>>, %arg6: memref<32x512xbf16, #tpu.memory_space<vmem>>, %arg7: memref<1x512xf32, #tpu.memory_space<vmem>>, %arg8: memref<32x512xbf16, #tpu.memory_space<vmem>>, %arg9: memref<1x512xf32, #tpu.memory_space<vmem>>, %arg10: memref<512x32xbf16, #tpu.memory_space<vmem>>, %arg11: memref<1x32xf32, #tpu.memory_space<vmem>>, %arg12: memref<32x128xbf16, #tpu.memory_space<vmem>>, %arg13: memref<1x128xf32, #tpu.memory_space<vmem>>, %arg14: memref<2x8x128xf32, #tpu.memory_space<vmem>>, %arg15: memref<2x4x8x128xbf16, #tpu.memory_space<vmem>>) attributes {dimension_semantics = [#tpu.dimension_semantics<parallel>], iteration_bounds = array<i64: 1>, scalar_prefetch = 0 : i64, scratch_operands = 0 : i64, tpu.core_type = #tpu.core_type<tc>, window_params = [{transform_indices = @transform_0, window_bounds = array<i64: 2, 8, 32>}, {transform_indices = @transform_1, window_bounds = array<i64: 2, 8, 32>}, {transform_indices = @transform_2, window_bounds = array<i64: 2, 1, 8>}, {pipeline_mode = #tpu.pipeline_mode<synchronous>, transform_indices = @transform_3, window_bounds = array<i64: 32, 512>}, {pipeline_mode = #tpu.pipeline_mode<synchronous>, transform_indices = @transform_4, window_bounds = array<i64: 1, 512>}, {pipeline_mode = #tpu.pipeline_mode<synchronous>, transform_indices = @transform_5, window_bounds = array<i64: 32, 512>}, {pipeline_mode = #tpu.pipeline_mode<synchronous>, transform_indices = @transform_6, window_bounds = array<i64: 1, 512>}, {pipeline_mode = #tpu.pipeline_mode<synchronous>, transform_indices = @transform_7, window_bounds = array<i64: 32, 512>}, {pipeline_mode = #tpu.pipeline_mode<synchronous>, transform_indices = @transform_8, window_bounds = array<i64: 1, 512>}, {pipeline_mode = #tpu.pipeline_mode<synchronous>, transform_indices = @transform_9, window_bounds = array<i64: 512, 32>}, {pipeline_mode = #tpu.pipeline_mode<synchronous>, transform_indices = @transform_10, window_bounds = array<i64: 1, 32>}, {pipeline_mode = #tpu.pipeline_mode<synchronous>, transform_indices = @transform_11, window_bounds = array<i64: 32, 128>}, {pipeline_mode = #tpu.pipeline_mode<synchronous>, transform_indices = @transform_12, window_bounds = array<i64: 1, 128>}, {transform_indices = @transform_13, window_bounds = array<i64: 2, 8, 128>}, {transform_indices = @transform_14, window_bounds = array<i64: 2, 4, 8, 128>}]} {
    %c0 = arith.constant 0 : index
    %c0_0 = arith.constant 0 : index
    %c0_1 = arith.constant 0 : index
    %0 = vector.load %arg1[%c0, %c0_0, %c0_1] : memref<2x8x32xf32, #tpu.memory_space<vmem>>, vector<2x8x32xf32>
    %1 = vector.shape_cast %0 : vector<2x8x32xf32> to vector<16x32xf32>
    %2 = arith.truncf %1 : vector<16x32xf32> to vector<16x32xbf16>
    %c0_2 = arith.constant 0 : index
    %c0_3 = arith.constant 0 : index
    %c0_4 = arith.constant 0 : index
    %3 = vector.load %arg2[%c0_2, %c0_3, %c0_4] : memref<2x8x32xf32, #tpu.memory_space<vmem>>, vector<2x8x32xf32>
    %4 = vector.shape_cast %3 : vector<2x8x32xf32> to vector<16x32xf32>
    %5 = arith.truncf %4 : vector<16x32xf32> to vector<16x32xbf16>
    %c0_5 = arith.constant 0 : index
    %c0_6 = arith.constant 0 : index
    %6 = vector.load %arg4[%c0_5, %c0_6] : memref<32x512xbf16, #tpu.memory_space<vmem>>, vector<32x512xbf16>
    %cst = arith.constant dense<0.000000e+00> : vector<16x512xf32>
    %7 = tpu.matmul %2, %6, %cst {dimension_numbers = #tpu.dot_dimension_numbers<[1], [0], [0], [1], [0, 0, 1, 1], [], []>} : vector<16x32xbf16>, vector<32x512xbf16>, vector<16x512xf32> -> vector<16x512xf32>
    %c0_7 = arith.constant 0 : index
    %c0_8 = arith.constant 0 : index
    %8 = vector.load %arg5[%c0_7, %c0_8] : memref<1x512xf32, #tpu.memory_space<vmem>>, vector<1x512xf32>
    %9 = vector.broadcast %8 : vector<1x512xf32> to vector<16x512xf32>
    %10 = arith.addf %7, %9 : vector<16x512xf32>
    %c0_9 = arith.constant 0 : index
    %c0_10 = arith.constant 0 : index
    %11 = vector.load %arg6[%c0_9, %c0_10] : memref<32x512xbf16, #tpu.memory_space<vmem>>, vector<32x512xbf16>
    %cst_11 = arith.constant dense<0.000000e+00> : vector<16x512xf32>
    %12 = tpu.matmul %5, %11, %cst_11 {dimension_numbers = #tpu.dot_dimension_numbers<[1], [0], [0], [1], [0, 0, 1, 1], [], []>} : vector<16x32xbf16>, vector<32x512xbf16>, vector<16x512xf32> -> vector<16x512xf32>
    %c0_12 = arith.constant 0 : index
    %c0_13 = arith.constant 0 : index
    %13 = vector.load %arg7[%c0_12, %c0_13] : memref<1x512xf32, #tpu.memory_space<vmem>>, vector<1x512xf32>
    %14 = vector.broadcast %13 : vector<1x512xf32> to vector<16x512xf32>
    %15 = arith.addf %12, %14 : vector<16x512xf32>
    %c0_14 = arith.constant 0 : index
    %c0_15 = arith.constant 0 : index
    %16 = vector.load %arg8[%c0_14, %c0_15] : memref<32x512xbf16, #tpu.memory_space<vmem>>, vector<32x512xbf16>
    %cst_16 = arith.constant dense<0.000000e+00> : vector<16x512xf32>
    %17 = tpu.matmul %5, %16, %cst_16 {dimension_numbers = #tpu.dot_dimension_numbers<[1], [0], [0], [1], [0, 0, 1, 1], [], []>} : vector<16x32xbf16>, vector<32x512xbf16>, vector<16x512xf32> -> vector<16x512xf32>
    %c0_17 = arith.constant 0 : index
    %c0_18 = arith.constant 0 : index
    %18 = vector.load %arg9[%c0_17, %c0_18] : memref<1x512xf32, #tpu.memory_space<vmem>>, vector<1x512xf32>
    %19 = vector.broadcast %18 : vector<1x512xf32> to vector<16x512xf32>
    %20 = arith.addf %17, %19 : vector<16x512xf32>
    %21 = arith.truncf %10 : vector<16x512xf32> to vector<16x512xbf16>
    %22 = vector.shape_cast %21 : vector<16x512xbf16> to vector<2x8x512xbf16>
    %23 = arith.truncf %15 : vector<16x512xf32> to vector<16x512xbf16>
    %24 = vector.shape_cast %23 : vector<16x512xbf16> to vector<2x8x512xbf16>
    %25 = arith.truncf %20 : vector<16x512xf32> to vector<16x512xbf16>
    %26 = vector.shape_cast %25 : vector<16x512xbf16> to vector<2x8x512xbf16>
    %c0_19 = arith.constant 0 : index
    %c0_20 = arith.constant 0 : index
    %c0_21 = arith.constant 0 : index
    %27 = vector.load %arg3[%c0_19, %c0_20, %c0_21] : memref<2x1x8xf32, #tpu.memory_space<vmem>>, vector<2x1x8xf32>
    %cst_22 = arith.constant 0.000000e+00 : f32
    %28 = vector.broadcast %cst_22 : f32 to vector<2x1x8xf32>
    %29 = arith.cmpf oeq, %27, %28 : vector<2x1x8xf32>
    %cst_23 = arith.constant -1.000000e+30 : f32
    %cst_24 = arith.constant 0.000000e+00 : f32
    %30 = vector.broadcast %cst_23 : f32 to vector<2x1x8xf32>
    %31 = vector.broadcast %cst_24 : f32 to vector<2x1x8xf32>
    %32 = arith.select %29, %30, %31 : vector<2x1x8xi1>, vector<2x1x8xf32>
    %cst_25 = arith.constant 0.000000e+00 : bf16
    %33 = vector.broadcast %cst_25 : bf16 to vector<2x8x120xbf16>
    %cst_26 = arith.constant 0.000000e+00 : f32
    %34 = vector.broadcast %cst_26 : f32 to vector<16x32xf32>
    %35 = vector.extract_strided_slice %22 {offsets = [0, 0, 0], sizes = [2, 8, 128], strides = [1, 1, 1]} : vector<2x8x512xbf16> to vector<2x8x128xbf16>
    %36 = vector.extract_strided_slice %24 {offsets = [0, 0, 0], sizes = [2, 8, 128], strides = [1, 1, 1]} : vector<2x8x512xbf16> to vector<2x8x128xbf16>
    %37 = vector.extract_strided_slice %26 {offsets = [0, 0, 0], sizes = [2, 8, 128], strides = [1, 1, 1]} : vector<2x8x512xbf16> to vector<2x8x128xbf16>
    "tpu.trace_start"() <{level = 10 : i32, message = "bqd,bkd->bqk"}> : () -> ()
    %cst_27 = arith.constant dense<0.000000e+00> : vector<2x8x8xf32>
    %38 = tpu.matmul %35, %36, %cst_27 {dimension_numbers = #tpu.dot_dimension_numbers<[2], [2], [1], [1], [0, 0, 0, 1, 1, 1], [0], [0]>} : vector<2x8x128xbf16>, vector<2x8x128xbf16>, vector<2x8x8xf32> -> vector<2x8x8xf32>
    "tpu.trace_stop"() : () -> ()
    %39 = vector.broadcast %32 : vector<2x1x8xf32> to vector<2x8x8xf32>
    %40 = arith.addf %38, %39 : vector<2x8x8xf32>
    %cst_28 = arith.constant dense<0xFF800000> : vector<2x8xf32>
    %41 = vector.multi_reduction <maximumf>, %40, %cst_28 [2] : vector<2x8x8xf32> to vector<2x8xf32>
    %42 = vector.shape_cast %41 : vector<2x8xf32> to vector<2x8x1xf32>
    %43 = vector.broadcast %42 : vector<2x8x1xf32> to vector<2x8x8xf32>
    %44 = arith.subf %40, %43 : vector<2x8x8xf32>
    %45 = math.exp %44 : vector<2x8x8xf32>
    %cst_29 = arith.constant dense<0.000000e+00> : vector<2x8xf32>
    %46 = vector.multi_reduction <add>, %45, %cst_29 [2] : vector<2x8x8xf32> to vector<2x8xf32>
    %47 = vector.shape_cast %46 : vector<2x8xf32> to vector<2x8x1xf32>
    %cst_30 = arith.constant 1.000000e+00 : f32
    %48 = vector.broadcast %cst_30 : f32 to vector<2x8x1xf32>
    %49 = arith.divf %48, %47 : vector<2x8x1xf32>
    %50 = vector.broadcast %49 : vector<2x8x1xf32> to vector<2x8x8xf32>
    %51 = arith.mulf %45, %50 : vector<2x8x8xf32>
    %52 = arith.truncf %51 : vector<2x8x8xf32> to vector<2x8x8xbf16>
    %53 = tpu.concatenate %52, %33 in 2 : vector<2x8x8xbf16>, vector<2x8x120xbf16> -> vector<2x8x128xbf16>
    %c0_31 = arith.constant 0 : index
    %c0_32 = arith.constant 0 : index
    %c0_33 = arith.constant 0 : index
    %c0_34 = arith.constant 0 : index
    %54 = vector.load %arg15[%c0_31, %c0_32, %c0_33, %c0_34] : memref<2x4x8x128xbf16, #tpu.memory_space<vmem>>, vector<2x1x8x128xbf16>
    %55 = vector.shape_cast %54 : vector<2x1x8x128xbf16> to vector<2x8x128xbf16>
    %56 = vector.shape_cast %53 : vector<2x8x128xbf16> to vector<2x1x8x128xbf16>
    tpu.vector_store %arg15[%c0_31, %c0_32, %c0_33, %c0_34], %56 {strides = array<i32>} : memref<2x4x8x128xbf16, #tpu.memory_space<vmem>>, vector<2x1x8x128xbf16>,
    "tpu.trace_start"() <{level = 10 : i32, message = "bqk,bkd->bqd"}> : () -> ()
    %cst_35 = arith.constant dense<0.000000e+00> : vector<2x8x128xf32>
    %57 = tpu.matmul %52, %37, %cst_35 {dimension_numbers = #tpu.dot_dimension_numbers<[2], [1], [1], [2], [0, 0, 0, 1, 1, 2], [0], [0]>} : vector<2x8x8xbf16>, vector<2x8x128xbf16>, vector<2x8x128xf32> -> vector<2x8x128xf32>
    "tpu.trace_stop"() : () -> ()
    %58 = vector.shape_cast %57 : vector<2x8x128xf32> to vector<16x128xf32>
    %59 = arith.truncf %58 : vector<16x128xf32> to vector<16x128xbf16>
    %c0_36 = arith.constant 0 : index
    %c0_37 = arith.constant 0 : index
    %60 = vector.load %arg10[%c0_36, %c0_37] : memref<512x32xbf16, #tpu.memory_space<vmem>>, vector<128x32xbf16>
    %cst_38 = arith.constant dense<0.000000e+00> : vector<16x32xf32>
    %61 = tpu.matmul %59, %60, %cst_38 {dimension_numbers = #tpu.dot_dimension_numbers<[1], [0], [0], [1], [0, 0, 1, 1], [], []>} : vector<16x128xbf16>, vector<128x32xbf16>, vector<16x32xf32> -> vector<16x32xf32>
    %62 = arith.addf %34, %61 : vector<16x32xf32>
    %63 = vector.extract_strided_slice %22 {offsets = [0, 0, 128], sizes = [2, 8, 128], strides = [1, 1, 1]} : vector<2x8x512xbf16> to vector<2x8x128xbf16>
    %64 = vector.extract_strided_slice %24 {offsets = [0, 0, 128], sizes = [2, 8, 128], strides = [1, 1, 1]} : vector<2x8x512xbf16> to vector<2x8x128xbf16>
    %65 = vector.extract_strided_slice %26 {offsets = [0, 0, 128], sizes = [2, 8, 128], strides = [1, 1, 1]} : vector<2x8x512xbf16> to vector<2x8x128xbf16>
    "tpu.trace_start"() <{level = 10 : i32, message = "bqd,bkd->bqk"}> : () -> ()
    %cst_39 = arith.constant dense<0.000000e+00> : vector<2x8x8xf32>
    %66 = tpu.matmul %63, %64, %cst_39 {dimension_numbers = #tpu.dot_dimension_numbers<[2], [2], [1], [1], [0, 0, 0, 1, 1, 1], [0], [0]>} : vector<2x8x128xbf16>, vector<2x8x128xbf16>, vector<2x8x8xf32> -> vector<2x8x8xf32>
    "tpu.trace_stop"() : () -> ()
    %67 = vector.broadcast %32 : vector<2x1x8xf32> to vector<2x8x8xf32>
    %68 = arith.addf %66, %67 : vector<2x8x8xf32>
    %cst_40 = arith.constant dense<0xFF800000> : vector<2x8xf32>
    %69 = vector.multi_reduction <maximumf>, %68, %cst_40 [2] : vector<2x8x8xf32> to vector<2x8xf32>
    %70 = vector.shape_cast %69 : vector<2x8xf32> to vector<2x8x1xf32>
    %71 = vector.broadcast %70 : vector<2x8x1xf32> to vector<2x8x8xf32>
    %72 = arith.subf %68, %71 : vector<2x8x8xf32>
    %73 = math.exp %72 : vector<2x8x8xf32>
    %cst_41 = arith.constant dense<0.000000e+00> : vector<2x8xf32>
    %74 = vector.multi_reduction <add>, %73, %cst_41 [2] : vector<2x8x8xf32> to vector<2x8xf32>
    %75 = vector.shape_cast %74 : vector<2x8xf32> to vector<2x8x1xf32>
    %cst_42 = arith.constant 1.000000e+00 : f32
    %76 = vector.broadcast %cst_42 : f32 to vector<2x8x1xf32>
    %77 = arith.divf %76, %75 : vector<2x8x1xf32>
    %78 = vector.broadcast %77 : vector<2x8x1xf32> to vector<2x8x8xf32>
    %79 = arith.mulf %73, %78 : vector<2x8x8xf32>
    %80 = arith.truncf %79 : vector<2x8x8xf32> to vector<2x8x8xbf16>
    %81 = tpu.concatenate %80, %33 in 2 : vector<2x8x8xbf16>, vector<2x8x120xbf16> -> vector<2x8x128xbf16>
    %c0_43 = arith.constant 0 : index
    %c1 = arith.constant 1 : index
    %c0_44 = arith.constant 0 : index
    %c0_45 = arith.constant 0 : index
    %82 = vector.load %arg15[%c0_43, %c1, %c0_44, %c0_45] : memref<2x4x8x128xbf16, #tpu.memory_space<vmem>>, vector<2x1x8x128xbf16>
    %83 = vector.shape_cast %82 : vector<2x1x8x128xbf16> to vector<2x8x128xbf16>
    %84 = vector.shape_cast %81 : vector<2x8x128xbf16> to vector<2x1x8x128xbf16>
    tpu.vector_store %arg15[%c0_43, %c1, %c0_44, %c0_45], %84 {strides = array<i32>} : memref<2x4x8x128xbf16, #tpu.memory_space<vmem>>, vector<2x1x8x128xbf16>,
    "tpu.trace_start"() <{level = 10 : i32, message = "bqk,bkd->bqd"}> : () -> ()
    %cst_46 = arith.constant dense<0.000000e+00> : vector<2x8x128xf32>
    %85 = tpu.matmul %80, %65, %cst_46 {dimension_numbers = #tpu.dot_dimension_numbers<[2], [1], [1], [2], [0, 0, 0, 1, 1, 2], [0], [0]>} : vector<2x8x8xbf16>, vector<2x8x128xbf16>, vector<2x8x128xf32> -> vector<2x8x128xf32>
    "tpu.trace_stop"() : () -> ()
    %86 = vector.shape_cast %85 : vector<2x8x128xf32> to vector<16x128xf32>
    %87 = arith.truncf %86 : vector<16x128xf32> to vector<16x128xbf16>
    %c128 = arith.constant 128 : index
    %c0_47 = arith.constant 0 : index
    %88 = vector.load %arg10[%c128, %c0_47] : memref<512x32xbf16, #tpu.memory_space<vmem>>, vector<128x32xbf16>
    %cst_48 = arith.constant dense<0.000000e+00> : vector<16x32xf32>
    %89 = tpu.matmul %87, %88, %cst_48 {dimension_numbers = #tpu.dot_dimension_numbers<[1], [0], [0], [1], [0, 0, 1, 1], [], []>} : vector<16x128xbf16>, vector<128x32xbf16>, vector<16x32xf32> -> vector<16x32xf32>
    %90 = arith.addf %62, %89 : vector<16x32xf32>
    %91 = vector.extract_strided_slice %22 {offsets = [0, 0, 256], sizes = [2, 8, 128], strides = [1, 1, 1]} : vector<2x8x512xbf16> to vector<2x8x128xbf16>
    %92 = vector.extract_strided_slice %24 {offsets = [0, 0, 256], sizes = [2, 8, 128], strides = [1, 1, 1]} : vector<2x8x512xbf16> to vector<2x8x128xbf16>
    %93 = vector.extract_strided_slice %26 {offsets = [0, 0, 256], sizes = [2, 8, 128], strides = [1, 1, 1]} : vector<2x8x512xbf16> to vector<2x8x128xbf16>
    "tpu.trace_start"() <{level = 10 : i32, message = "bqd,bkd->bqk"}> : () -> ()
    %cst_49 = arith.constant dense<0.000000e+00> : vector<2x8x8xf32>
    %94 = tpu.matmul %91, %92, %cst_49 {dimension_numbers = #tpu.dot_dimension_numbers<[2], [2], [1], [1], [0, 0, 0, 1, 1, 1], [0], [0]>} : vector<2x8x128xbf16>, vector<2x8x128xbf16>, vector<2x8x8xf32> -> vector<2x8x8xf32>
    "tpu.trace_stop"() : () -> ()
    %95 = vector.broadcast %32 : vector<2x1x8xf32> to vector<2x8x8xf32>
    %96 = arith.addf %94, %95 : vector<2x8x8xf32>
    %cst_50 = arith.constant dense<0xFF800000> : vector<2x8xf32>
    %97 = vector.multi_reduction <maximumf>, %96, %cst_50 [2] : vector<2x8x8xf32> to vector<2x8xf32>
    %98 = vector.shape_cast %97 : vector<2x8xf32> to vector<2x8x1xf32>
    %99 = vector.broadcast %98 : vector<2x8x1xf32> to vector<2x8x8xf32>
    %100 = arith.subf %96, %99 : vector<2x8x8xf32>
    %101 = math.exp %100 : vector<2x8x8xf32>
    %cst_51 = arith.constant dense<0.000000e+00> : vector<2x8xf32>
    %102 = vector.multi_reduction <add>, %101, %cst_51 [2] : vector<2x8x8xf32> to vector<2x8xf32>
    %103 = vector.shape_cast %102 : vector<2x8xf32> to vector<2x8x1xf32>
    %cst_52 = arith.constant 1.000000e+00 : f32
    %104 = vector.broadcast %cst_52 : f32 to vector<2x8x1xf32>
    %105 = arith.divf %104, %103 : vector<2x8x1xf32>
    %106 = vector.broadcast %105 : vector<2x8x1xf32> to vector<2x8x8xf32>
    %107 = arith.mulf %101, %106 : vector<2x8x8xf32>
    %108 = arith.truncf %107 : vector<2x8x8xf32> to vector<2x8x8xbf16>
    %109 = tpu.concatenate %108, %33 in 2 : vector<2x8x8xbf16>, vector<2x8x120xbf16> -> vector<2x8x128xbf16>
    %c0_53 = arith.constant 0 : index
    %c2 = arith.constant 2 : index
    %c0_54 = arith.constant 0 : index
    %c0_55 = arith.constant 0 : index
    %110 = vector.load %arg15[%c0_53, %c2, %c0_54, %c0_55] : memref<2x4x8x128xbf16, #tpu.memory_space<vmem>>, vector<2x1x8x128xbf16>
    %111 = vector.shape_cast %110 : vector<2x1x8x128xbf16> to vector<2x8x128xbf16>
    %112 = vector.shape_cast %109 : vector<2x8x128xbf16> to vector<2x1x8x128xbf16>
    tpu.vector_store %arg15[%c0_53, %c2, %c0_54, %c0_55], %112 {strides = array<i32>} : memref<2x4x8x128xbf16, #tpu.memory_space<vmem>>, vector<2x1x8x128xbf16>,
    "tpu.trace_start"() <{level = 10 : i32, message = "bqk,bkd->bqd"}> : () -> ()
    %cst_56 = arith.constant dense<0.000000e+00> : vector<2x8x128xf32>
    %113 = tpu.matmul %108, %93, %cst_56 {dimension_numbers = #tpu.dot_dimension_numbers<[2], [1], [1], [2], [0, 0, 0, 1, 1, 2], [0], [0]>} : vector<2x8x8xbf16>, vector<2x8x128xbf16>, vector<2x8x128xf32> -> vector<2x8x128xf32>
    "tpu.trace_stop"() : () -> ()
    %114 = vector.shape_cast %113 : vector<2x8x128xf32> to vector<16x128xf32>
    %115 = arith.truncf %114 : vector<16x128xf32> to vector<16x128xbf16>
    %c256 = arith.constant 256 : index
    %c0_57 = arith.constant 0 : index
    %116 = vector.load %arg10[%c256, %c0_57] : memref<512x32xbf16, #tpu.memory_space<vmem>>, vector<128x32xbf16>
    %cst_58 = arith.constant dense<0.000000e+00> : vector<16x32xf32>
    %117 = tpu.matmul %115, %116, %cst_58 {dimension_numbers = #tpu.dot_dimension_numbers<[1], [0], [0], [1], [0, 0, 1, 1], [], []>} : vector<16x128xbf16>, vector<128x32xbf16>, vector<16x32xf32> -> vector<16x32xf32>
    %118 = arith.addf %90, %117 : vector<16x32xf32>
    %119 = vector.extract_strided_slice %22 {offsets = [0, 0, 384], sizes = [2, 8, 128], strides = [1, 1, 1]} : vector<2x8x512xbf16> to vector<2x8x128xbf16>
    %120 = vector.extract_strided_slice %24 {offsets = [0, 0, 384], sizes = [2, 8, 128], strides = [1, 1, 1]} : vector<2x8x512xbf16> to vector<2x8x128xbf16>
    %121 = vector.extract_strided_slice %26 {offsets = [0, 0, 384], sizes = [2, 8, 128], strides = [1, 1, 1]} : vector<2x8x512xbf16> to vector<2x8x128xbf16>
    "tpu.trace_start"() <{level = 10 : i32, message = "bqd,bkd->bqk"}> : () -> ()
    %cst_59 = arith.constant dense<0.000000e+00> : vector<2x8x8xf32>
    %122 = tpu.matmul %119, %120, %cst_59 {dimension_numbers = #tpu.dot_dimension_numbers<[2], [2], [1], [1], [0, 0, 0, 1, 1, 1], [0], [0]>} : vector<2x8x128xbf16>, vector<2x8x128xbf16>, vector<2x8x8xf32> -> vector<2x8x8xf32>
    "tpu.trace_stop"() : () -> ()
    %123 = vector.broadcast %32 : vector<2x1x8xf32> to vector<2x8x8xf32>
    %124 = arith.addf %122, %123 : vector<2x8x8xf32>
    %cst_60 = arith.constant dense<0xFF800000> : vector<2x8xf32>
    %125 = vector.multi_reduction <maximumf>, %124, %cst_60 [2] : vector<2x8x8xf32> to vector<2x8xf32>
    %126 = vector.shape_cast %125 : vector<2x8xf32> to vector<2x8x1xf32>
    %127 = vector.broadcast %126 : vector<2x8x1xf32> to vector<2x8x8xf32>
    %128 = arith.subf %124, %127 : vector<2x8x8xf32>
    %129 = math.exp %128 : vector<2x8x8xf32>
    %cst_61 = arith.constant dense<0.000000e+00> : vector<2x8xf32>
    %130 = vector.multi_reduction <add>, %129, %cst_61 [2] : vector<2x8x8xf32> to vector<2x8xf32>
    %131 = vector.shape_cast %130 : vector<2x8xf32> to vector<2x8x1xf32>
    %cst_62 = arith.constant 1.000000e+00 : f32
    %132 = vector.broadcast %cst_62 : f32 to vector<2x8x1xf32>
    %133 = arith.divf %132, %131 : vector<2x8x1xf32>
    %134 = vector.broadcast %133 : vector<2x8x1xf32> to vector<2x8x8xf32>
    %135 = arith.mulf %129, %134 : vector<2x8x8xf32>
    %136 = arith.truncf %135 : vector<2x8x8xf32> to vector<2x8x8xbf16>
    %137 = tpu.concatenate %136, %33 in 2 : vector<2x8x8xbf16>, vector<2x8x120xbf16> -> vector<2x8x128xbf16>
    %c0_63 = arith.constant 0 : index
    %c3 = arith.constant 3 : index
    %c0_64 = arith.constant 0 : index
    %c0_65 = arith.constant 0 : index
    %138 = vector.load %arg15[%c0_63, %c3, %c0_64, %c0_65] : memref<2x4x8x128xbf16, #tpu.memory_space<vmem>>, vector<2x1x8x128xbf16>
    %139 = vector.shape_cast %138 : vector<2x1x8x128xbf16> to vector<2x8x128xbf16>
    %140 = vector.shape_cast %137 : vector<2x8x128xbf16> to vector<2x1x8x128xbf16>
    tpu.vector_store %arg15[%c0_63, %c3, %c0_64, %c0_65], %140 {strides = array<i32>} : memref<2x4x8x128xbf16, #tpu.memory_space<vmem>>, vector<2x1x8x128xbf16>,
    "tpu.trace_start"() <{level = 10 : i32, message = "bqk,bkd->bqd"}> : () -> ()
    %cst_66 = arith.constant dense<0.000000e+00> : vector<2x8x128xf32>
    %141 = tpu.matmul %136, %121, %cst_66 {dimension_numbers = #tpu.dot_dimension_numbers<[2], [1], [1], [2], [0, 0, 0, 1, 1, 2], [0], [0]>} : vector<2x8x8xbf16>, vector<2x8x128xbf16>, vector<2x8x128xf32> -> vector<2x8x128xf32>
    "tpu.trace_stop"() : () -> ()
    %142 = vector.shape_cast %141 : vector<2x8x128xf32> to vector<16x128xf32>
    %143 = arith.truncf %142 : vector<16x128xf32> to vector<16x128xbf16>
    %c384 = arith.constant 384 : index
    %c0_67 = arith.constant 0 : index
    %144 = vector.load %arg10[%c384, %c0_67] : memref<512x32xbf16, #tpu.memory_space<vmem>>, vector<128x32xbf16>
    %cst_68 = arith.constant dense<0.000000e+00> : vector<16x32xf32>
    %145 = tpu.matmul %143, %144, %cst_68 {dimension_numbers = #tpu.dot_dimension_numbers<[1], [0], [0], [1], [0, 0, 1, 1], [], []>} : vector<16x128xbf16>, vector<128x32xbf16>, vector<16x32xf32> -> vector<16x32xf32>
    %146 = arith.addf %118, %145 : vector<16x32xf32>
    %c0_69 = arith.constant 0 : index
    %c0_70 = arith.constant 0 : index
    %147 = vector.load %arg11[%c0_69, %c0_70] : memref<1x32xf32, #tpu.memory_space<vmem>>, vector<1x32xf32>
    %148 = vector.broadcast %147 : vector<1x32xf32> to vector<16x32xf32>
    %149 = arith.addf %146, %148 : vector<16x32xf32>
    %150 = arith.truncf %149 : vector<16x32xf32> to vector<16x32xbf16>
    %c0_71 = arith.constant 0 : index
    %c0_72 = arith.constant 0 : index
    %151 = vector.load %arg12[%c0_71, %c0_72] : memref<32x128xbf16, #tpu.memory_space<vmem>>, vector<32x128xbf16>
    %cst_73 = arith.constant dense<0.000000e+00> : vector<16x128xf32>
    %152 = tpu.matmul %150, %151, %cst_73 {dimension_numbers = #tpu.dot_dimension_numbers<[1], [0], [0], [1], [0, 0, 1, 1], [], []>} : vector<16x32xbf16>, vector<32x128xbf16>, vector<16x128xf32> -> vector<16x128xf32>
    %c0_74 = arith.constant 0 : index
    %c0_75 = arith.constant 0 : index
    %153 = vector.load %arg13[%c0_74, %c0_75] : memref<1x128xf32, #tpu.memory_space<vmem>>, vector<1x128xf32>
    %154 = vector.broadcast %153 : vector<1x128xf32> to vector<16x128xf32>
    %155 = arith.addf %152, %154 : vector<16x128xf32>
    %156 = vector.shape_cast %155 : vector<16x128xf32> to vector<2x8x128xf32>
    %c0_76 = arith.constant 0 : index
    %c0_77 = arith.constant 0 : index
    %c0_78 = arith.constant 0 : index
    %157 = vector.load %arg14[%c0_76, %c0_77, %c0_78] : memref<2x8x128xf32, #tpu.memory_space<vmem>>, vector<2x8x128xf32>
    tpu.vector_store %arg14[%c0_76, %c0_77, %c0_78], %156 {strides = array<i32>} : memref<2x8x128xf32, #tpu.memory_space<vmem>>, vector<2x8x128xf32>,
    return
  }
  func.func @transform_0(%arg0: i32) -> (i32, i32, i32) {
    %c0_i32 = arith.constant 0 : i32
    %c0_i32_0 = arith.constant 0 : i32
    %c0_i32_1 = arith.constant 0 : i32
    return %arg0, %c0_i32, %c0_i32_0 : i32, i32, i32
  }
  func.func @transform_1(%arg0: i32) -> (i32, i32, i32) {
    %c0_i32 = arith.constant 0 : i32
    %c0_i32_0 = arith.constant 0 : i32
    %c0_i32_1 = arith.constant 0 : i32
    return %arg0, %c0_i32, %c0_i32_0 : i32, i32, i32
  }
  func.func @transform_2(%arg0: i32) -> (i32, i32, i32) {
    %c0_i32 = arith.constant 0 : i32
    %c0_i32_0 = arith.constant 0 : i32
    %c0_i32_1 = arith.constant 0 : i32
    return %arg0, %c0_i32, %c0_i32_0 : i32, i32, i32
  }
  func.func @transform_3(%arg0: i32) -> (i32, i32) {
    %c0_i32 = arith.constant 0 : i32
    %c0_i32_0 = arith.constant 0 : i32
    %c0_i32_1 = arith.constant 0 : i32
    return %c0_i32, %c0_i32_0 : i32, i32
  }
  func.func @transform_4(%arg0: i32) -> (i32, i32) {
    %c0_i32 = arith.constant 0 : i32
    %c0_i32_0 = arith.constant 0 : i32
    %c0_i32_1 = arith.constant 0 : i32
    return %c0_i32, %c0_i32_0 : i32, i32
  }
  func.func @transform_5(%arg0: i32) -> (i32, i32) {
    %c0_i32 = arith.constant 0 : i32
    %c0_i32_0 = arith.constant 0 : i32
    %c0_i32_1 = arith.constant 0 : i32
    return %c0_i32, %c0_i32_0 : i32, i32
  }
  func.func @transform_6(%arg0: i32) -> (i32, i32) {
    %c0_i32 = arith.constant 0 : i32
    %c0_i32_0 = arith.constant 0 : i32
    %c0_i32_1 = arith.constant 0 : i32
    return %c0_i32, %c0_i32_0 : i32, i32
  }
  func.func @transform_7(%arg0: i32) -> (i32, i32) {
    %c0_i32 = arith.constant 0 : i32
    %c0_i32_0 = arith.constant 0 : i32
    %c0_i32_1 = arith.constant 0 : i32
    return %c0_i32, %c0_i32_0 : i32, i32
  }
  func.func @transform_8(%arg0: i32) -> (i32, i32) {
    %c0_i32 = arith.constant 0 : i32
    %c0_i32_0 = arith.constant 0 : i32
    %c0_i32_1 = arith.constant 0 : i32
    return %c0_i32, %c0_i32_0 : i32, i32
  }
  func.func @transform_9(%arg0: i32) -> (i32, i32) {
    %c0_i32 = arith.constant 0 : i32
    %c0_i32_0 = arith.constant 0 : i32
    %c0_i32_1 = arith.constant 0 : i32
    return %c0_i32, %c0_i32_0 : i32, i32
  }
  func.func @transform_10(%arg0: i32) -> (i32, i32) {
    %c0_i32 = arith.constant 0 : i32
    %c0_i32_0 = arith.constant 0 : i32
    %c0_i32_1 = arith.constant 0 : i32
    return %c0_i32, %c0_i32_0 : i32, i32
  }
  func.func @transform_11(%arg0: i32) -> (i32, i32) {
    %c0_i32 = arith.constant 0 : i32
    %c0_i32_0 = arith.constant 0 : i32
    %c0_i32_1 = arith.constant 0 : i32
    return %c0_i32, %c0_i32_0 : i32, i32
  }
  func.func @transform_12(%arg0: i32) -> (i32, i32) {
    %c0_i32 = arith.constant 0 : i32
    %c0_i32_0 = arith.constant 0 : i32
    %c0_i32_1 = arith.constant 0 : i32
    return %c0_i32, %c0_i32_0 : i32, i32
  }
  func.func @transform_13(%arg0: i32) -> (i32, i32, i32) {
    %c0_i32 = arith.constant 0 : i32
    %c0_i32_0 = arith.constant 0 : i32
    %c0_i32_1 = arith.constant 0 : i32
    return %arg0, %c0_i32, %c0_i32_0 : i32, i32, i32
  }
  func.func @transform_14(%arg0: i32) -> (i32, i32, i32, i32) {
    %c0_i32 = arith.constant 0 : i32
    %c0_i32_0 = arith.constant 0 : i32
    %c0_i32_1 = arith.constant 0 : i32
    %c0_i32_2 = arith.constant 0 : i32
    return %arg0, %c0_i32, %c0_i32_0, %c0_i32_1 : i32, i32, i32, i32
  }
}

</mosaic_0001>

<llo_original>
// kernel: tpu_custom_call.1
$region0: #{tpu_custom_call.1}
  #allocation0 [shape = 'u32[]', space=smem, size = 0x4, offset = 0x4, fixed_abs, tag = 'smem constant byte address 0x4 - core index']
  #allocation1 [shape = 'u32[144,128]{1,0:T(1,128)}', space=vmem, size = 0x12000, scoped, tag = 'internal scratch']
  %s0 = inlined_call_operand.vmem [shape: f32[2,8,32], index: 0, kind: input, shape index: {}]
  %s1 = inlined_call_operand.vmem [shape: f32[2,8,32], index: 1, kind: input, shape index: {}]
  %s2 = inlined_call_operand.vmem [shape: f32[2,1,8], index: 2, kind: input, shape index: {}]
  %s3 = inlined_call_operand.vmem [shape: bf16[32,512], index: 3, kind: input, shape index: {}]
  %s4 = inlined_call_operand.vmem [shape: f32[1,512], index: 4, kind: input, shape index: {}]
  %s5 = inlined_call_operand.vmem [shape: bf16[32,512], index: 5, kind: input, shape index: {}]
  %s6 = inlined_call_operand.vmem [shape: f32[1,512], index: 6, kind: input, shape index: {}]
  %s7 = inlined_call_operand.vmem [shape: bf16[32,512], index: 7, kind: input, shape index: {}]
  %s8 = inlined_call_operand.vmem [shape: f32[1,512], index: 8, kind: input, shape index: {}]
  %s9 = inlined_call_operand.vmem [shape: bf16[512,32], index: 9, kind: input, shape index: {}]
  %s10 = inlined_call_operand.vmem [shape: f32[1,32], index: 10, kind: input, shape index: {}]
  %s11 = inlined_call_operand.vmem [shape: bf16[32,128], index: 11, kind: input, shape index: {}]
  %s12 = inlined_call_operand.vmem [shape: f32[1,128], index: 12, kind: input, shape index: {}]
  %s13 = inlined_call_operand.hbm [shape: f32[2,8,128], index: 13, kind: output, shape index: {0}]
  %s14 = inlined_call_operand.hbm [shape: bf16[2,4,8,128], index: 14, kind: output, shape index: {1}]
  %15 = xla_tuple %s13, %s14
  %s16 = sld [smem:[#allocation0]]
  $region70: #{tpu_custom_call.1} parent=0
    _
  %s18 = ssub.s32 1, %s16
  %s19 = scalar_select 0, %s18, %s16
  $region1: #{tpu_custom_call.1} parent=0
    #allocation2 [shape = 'u8[8192]{0}', space=vmem, size = 0x2000, scoped, tag = 'output window, operand 0, single buffered']
    #allocation3 [shape = 's32[1]{0}', space=sflag, size = 0x4, scoped, tag = 'scoped memory for tpu_custom_call.1']
    #allocation4 [shape = 'u8[16384]{0}', space=vmem, size = 0x4000, scoped, tag = 'output window, operand 1, single buffered']
    #allocation5 [shape = 's32[1]{0}', space=sflag, size = 0x4, scoped, tag = 'scoped memory for tpu_custom_call.1']
    %20 = vsyncpa [#allocation3], 0
    %21 = vsyncpa [#allocation5], 0
    // Predicated region
    $region2: #{tpu_custom_call.1} parent=1 // pred_check
      _
    $region3: #{tpu_custom_call.1} parent=1 // pred_check_branch
      %23 = sbr.rel (0) target = $region5
    $region4: #{tpu_custom_call.1} parent=1 // pred_region
      _
    $region5: #{tpu_custom_call.1} parent=1 // pred_fallthru
      _
    // Predicated region
    $region6: #{tpu_custom_call.1} parent=1 // pred_check
      _
    $region7: #{tpu_custom_call.1} parent=1 // pred_check_branch
      %25 = sbr.rel (0) target = $region9
    $region8: #{tpu_custom_call.1} parent=1 // pred_region
      _
    $region9: #{tpu_custom_call.1} parent=1 // pred_fallthru
      _
    // Predicated region
    $region10: #{tpu_custom_call.1} parent=1 // pred_check
      _
    $region11: #{tpu_custom_call.1} parent=1 // pred_check_branch
      %27 = sbr.rel (0) target = $region13
    $region12: #{tpu_custom_call.1} parent=1 // pred_region
      _
    $region13: #{tpu_custom_call.1} parent=1 // pred_fallthru
      _
    // Predicated region
    $region14: #{tpu_custom_call.1} parent=1 // pred_check
      _
    $region15: #{tpu_custom_call.1} parent=1 // pred_check_branch
      %29 = sbr.rel (0) target = $region17
    $region16: #{tpu_custom_call.1} parent=1 // pred_region
      _
    $region17: #{tpu_custom_call.1} parent=1 // pred_fallthru
      _
    // Predicated region
    $region18: #{tpu_custom_call.1} parent=1 // pred_check
      _
    $region19: #{tpu_custom_call.1} parent=1 // pred_check_branch
      %31 = sbr.rel (0) target = $region21
    $region20: #{tpu_custom_call.1} parent=1 // pred_region
      _
    $region21: #{tpu_custom_call.1} parent=1 // pred_fallthru
      _
    // Predicated region
    $region22: #{tpu_custom_call.1} parent=1 // pred_check
      _
    $region23: #{tpu_custom_call.1} parent=1 // pred_check_branch
      %33 = sbr.rel (0) target = $region25
    $region24: #{tpu_custom_call.1} parent=1 // pred_region
      _
    $region25: #{tpu_custom_call.1} parent=1 // pred_fallthru
      _
    // Predicated region
    $region26: #{tpu_custom_call.1} parent=1 // pred_check
      _
    $region27: #{tpu_custom_call.1} parent=1 // pred_check_branch
      %35 = sbr.rel (0) target = $region29
    $region28: #{tpu_custom_call.1} parent=1 // pred_region
      _
    $region29: #{tpu_custom_call.1} parent=1 // pred_fallthru
      _
    // Predicated region
    $region30: #{tpu_custom_call.1} parent=1 // pred_check
      _
    $region31: #{tpu_custom_call.1} parent=1 // pred_check_branch
      %37 = sbr.rel (0) target = $region33
    $region32: #{tpu_custom_call.1} parent=1 // pred_region
      _
    $region33: #{tpu_custom_call.1} parent=1 // pred_fallthru
      _
    // Predicated region
    $region34: #{tpu_custom_call.1} parent=1 // pred_check
      _
    $region35: #{tpu_custom_call.1} parent=1 // pred_check_branch
      %39 = sbr.rel (0) target = $region37
    $region36: #{tpu_custom_call.1} parent=1 // pred_region
      _
    $region37: #{tpu_custom_call.1} parent=1 // pred_fallthru
      _
    // Predicated region
    $region38: #{tpu_custom_call.1} parent=1 // pred_check
      _
    $region39: #{tpu_custom_call.1} parent=1 // pred_check_branch
      %41 = sbr.rel (0) target = $region41
    $region40: #{tpu_custom_call.1} parent=1 // pred_region
      _
    $region41: #{tpu_custom_call.1} parent=1 // pred_fallthru
      _
    // Predicated region
    $region42: #{tpu_custom_call.1} parent=1 // pred_check
      _
    $region43: #{tpu_custom_call.1} parent=1 // pred_check_branch
      %43 = sbr.rel (0) target = $region45
    $region44: #{tpu_custom_call.1} parent=1 // pred_region
      _
    $region45: #{tpu_custom_call.1} parent=1 // pred_fallthru
      _
    // Predicated region
    $region46: #{tpu_custom_call.1} parent=1 // pred_check
      _
    $region47: #{tpu_custom_call.1} parent=1 // pred_check_branch
      %45 = sbr.rel (0) target = $region49
    $region48: #{tpu_custom_call.1} parent=1 // pred_region
      _
    $region49: #{tpu_custom_call.1} parent=1 // pred_fallthru
      _
    // Predicated region
    $region50: #{tpu_custom_call.1} parent=1 // pred_check
      _
    $region51: #{tpu_custom_call.1} parent=1 // pred_check_branch
      %47 = sbr.rel (0) target = $region53
    $region52: #{tpu_custom_call.1} parent=1 // pred_region
      _
    $region53: #{tpu_custom_call.1} parent=1 // pred_fallthru
      _
    %v49 = vld [vmem:[%s0] sm:$0xff]
    %v50 = vld [vmem:[%s0 + $0x8] sm:$0xff]
    %v51 = vpack.c.bf16 %v50, %v49
    %v52 = vld [vmem:[%s1] sm:$0xff]
    %v53 = vld [vmem:[%s1 + $0x8] sm:$0xff]
    %v54 = vpack.c.bf16 %v53, %v52
    %v55 = vld [vmem:[%s3] sm:$0xff]
    %v56 = vld [vmem:[%s3 + $0x8] sm:$0xff]
    %v57 = vld [vmem:[%s3 + $0x10] sm:$0xff]
    %v58 = vld [vmem:[%s3 + $0x18] sm:$0xff]
    %v59 = vld [vmem:[%s3 + $0x20] sm:$0xff]
    %v60 = vld [vmem:[%s3 + $0x28] sm:$0xff]
    %v61 = vld [vmem:[%s3 + $0x30] sm:$0xff]
    %v62 = vld [vmem:[%s3 + $0x38] sm:$0xff]
    %v63 = vld [vmem:[%s4] sm:$0xf]
    %v65 = vlaneseq
    %v66 = vshrl.u32 %v65, 7
    %v67 = vsub.s32 0, %v66
    %v68 = vrot.slane %v63, %v67
    %v69 = vlaneseq
    %v70 = vshrl.u32 %v69, 7
    %v71 = vsub.s32 1, %v70
    %v72 = vrot.slane %v63, %v71
    %v73 = vlaneseq
    %v74 = vshrl.u32 %v73, 7
    %v75 = vsub.s32 2, %v74
    %v76 = vrot.slane %v63, %v75
    %v77 = vlaneseq
    %v78 = vshrl.u32 %v77, 7
    %v79 = vsub.s32 3, %v78
    %v80 = vrot.slane %v63, %v79
    %v93 = vunpack.c.l.b16 %v55
    %v94 = vunpack.c.h.b16 %v55
    %v95 = vunpack.c.l.b16 %v56
    %v96 = vunpack.c.h.b16 %v56
    %v97 = vunpack.c.l.b16 %v57
    %v98 = vunpack.c.h.b16 %v57
    %v99 = vunpack.c.l.b16 %v58
    %v100 = vunpack.c.h.b16 %v58
    %v101 = vunpack.c.l.b16 %v59
    %v102 = vunpack.c.h.b16 %v59
    %v103 = vunpack.c.l.b16 %v60
    %v104 = vunpack.c.h.b16 %v60
    %v105 = vunpack.c.l.b16 %v61
    %v106 = vunpack.c.h.b16 %v61
    %v107 = vunpack.c.l.b16 %v62
    %v108 = vunpack.c.h.b16 %v62
    %v109 = vpack.c.b16 %v97, %v93
    %v110 = vpack.c.b16 %v98, %v94
    %v111 = vpack.c.b16 %v99, %v95
    %v112 = vpack.c.b16 %v100, %v96
    %v113 = vpack.c.b16 %v105, %v101
    %v114 = vpack.c.b16 %v106, %v102
    %v115 = vpack.c.b16 %v107, %v103
    %v116 = vpack.c.b16 %v108, %v104
    %vm125 = vcmask 261120
    %v127 = vsel %vm125, %v51, 0
    %129 = vmatprep.subr.bf16.mxu0 %v110
    %130 = vmatpush1.bf16.msra.mxu0 %v109
    %131 = vmatprep.subr.bf16.mxu0 %v114
    %132 = vmatpush1.bf16.msra.mxu0 %v113
    %133 = vmatprep.subr.bf16.mxu0 0
    %134 = vmatpush1.bf16.msra.mxu0 0
    %135 = vmatprep.subr.bf16.mxu0 0
    %136 = vmatpush1.bf16.msra.mxu0 0
    %137 = vmatprep.subr.bf16.mxu0 0
    %138 = vmatpush1.bf16.msra.mxu0 0
    %139 = vmatprep.subr.bf16.mxu0 0
    %140 = vmatpush1.bf16.msra.mxu0 0
    %141 = vmatprep.subr.bf16.mxu0 0
    %142 = vmatpush1.bf16.msra.mxu0 0
    %143 = vmatprep.subr.bf16.mxu0 0
    %144 = vmatpush1.bf16.msra.mxu0 0
    %145 = vmatprep.subr.bf16.mxu0 0
    %146 = vmatpush1.bf16.msra.mxu0 0
    %147 = vmatprep.subr.bf16.mxu0 0
    %148 = vmatpush1.bf16.msra.mxu0 0
    %149 = vmatprep.subr.bf16.mxu0 0
    %150 = vmatpush1.bf16.msra.mxu0 0
    %151 = vmatprep.subr.bf16.mxu0 0
    %152 = vmatpush1.bf16.msra.mxu0 0
    %153 = vmatprep.subr.bf16.mxu0 0
    %154 = vmatpush1.bf16.msra.mxu0 0
    %155 = vmatprep.subr.bf16.mxu0 0
    %156 = vmatpush1.bf16.msra.mxu0 0
    %157 = vmatprep.subr.bf16.mxu0 0
    %158 = vmatpush1.bf16.msra.mxu0 0
    %159 = vmatprep.subr.bf16.mxu0 0
    %160 = vmatpush1.bf16.msra.mxu0 0
    %161 = vmatprep.mubr.bf16.mxu0 0
    %162 = vmatmul.mubr.bf16.gmra.mrb[0].mxu0 %v127
    %v163 = vpop.f32.mrb[0].mxu0
    %v164 = vadd.f32 %v68, %v163
    %v165 = vpop.f32.mrb[0].mxu0
    %v166 = vadd.f32 %v72, %v165
    %v167 = vpop.f32.mrb[0].mxu0
    %v168 = vadd.f32 %v68, %v167
    %v169 = vpop.f32.mrb[0].mxu0
    %v170 = vadd.f32 %v72, %v169
    %171 = vdwg.mxu0
    %172 = vmatprep.subr.bf16.mxu0 %v112
    %173 = vmatpush1.bf16.msra.mxu0 %v111
    %174 = vmatprep.subr.bf16.mxu0 %v116
    %175 = vmatpush1.bf16.msra.mxu0 %v115
    %176 = vmatprep.subr.bf16.mxu0 0
    %177 = vmatpush1.bf16.msra.mxu0 0
    %178 = vmatprep.subr.bf16.mxu0 0
    %179 = vmatpush1.bf16.msra.mxu0 0
    %180 = vmatprep.subr.bf16.mxu0 0
    %181 = vmatpush1.bf16.msra.mxu0 0
    %182 = vmatprep.subr.bf16.mxu0 0
    %183 = vmatpush1.bf16.msra.mxu0 0
    %184 = vmatprep.subr.bf16.mxu0 0
    %185 = vmatpush1.bf16.msra.mxu0 0
    %186 = vmatprep.subr.bf16.mxu0 0
    %187 = vmatpush1.bf16.msra.mxu0 0
    %188 = vmatprep.subr.bf16.mxu0 0
    %189 = vmatpush1.bf16.msra.mxu0 0
    %190 = vmatprep.subr.bf16.mxu0 0
    %191 = vmatpush1.bf16.msra.mxu0 0
    %192 = vmatprep.subr.bf16.mxu0 0
    %193 = vmatpush1.bf16.msra.mxu0 0
    %194 = vmatprep.subr.bf16.mxu0 0
    %195 = vmatpush1.bf16.msra.mxu0 0
    %196 = vmatprep.subr.bf16.mxu0 0
    %197 = vmatpush1.bf16.msra.mxu0 0
    %198 = vmatprep.subr.bf16.mxu0 0
    %199 = vmatpush1.bf16.msra.mxu0 0
    %200 = vmatprep.subr.bf16.mxu0 0
    %201 = vmatpush1.bf16.msra.mxu0 0
    %202 = vmatprep.subr.bf16.mxu0 0
    %203 = vmatpush1.bf16.msra.mxu0 0
    %204 = vmatprep.mubr.bf16.mxu0 0
    %205 = vmatmul.mubr.bf16.gmra.mrb[0].mxu0 %v127
    %v206 = vpop.f32.mrb[0].mxu0
    %v207 = vadd.f32 %v76, %v206
    %v208 = vpop.f32.mrb[0].mxu0
    %v209 = vadd.f32 %v80, %v208
    %v210 = vpop.f32.mrb[0].mxu0
    %v211 = vadd.f32 %v76, %v210
    %v212 = vpop.f32.mrb[0].mxu0
    %v213 = vadd.f32 %v80, %v212
    %214 = vdwg.mxu0
    %v215 = vld [vmem:[%s5] sm:$0xff]
    %v216 = vld [vmem:[%s5 + $0x8] sm:$0xff]
    %v217 = vld [vmem:[%s5 + $0x10] sm:$0xff]
    %v218 = vld [vmem:[%s5 + $0x18] sm:$0xff]
    %v219 = vld [vmem:[%s5 + $0x20] sm:$0xff]
    %v220 = vld [vmem:[%s5 + $0x28] sm:$0xff]
    %v221 = vld [vmem:[%s5 + $0x30] sm:$0xff]
    %v222 = vld [vmem:[%s5 + $0x38] sm:$0xff]
    %v223 = vld [vmem:[%s6] sm:$0xf]
    %v225 = vlaneseq
    %v226 = vshrl.u32 %v225, 7
    %v227 = vsub.s32 0, %v226
    %v228 = vrot.slane %v223, %v227
    %v229 = vlaneseq
    %v230 = vshrl.u32 %v229, 7
    %v231 = vsub.s32 1, %v230
    %v232 = vrot.slane %v223, %v231
    %v233 = vlaneseq
    %v234 = vshrl.u32 %v233, 7
    %v235 = vsub.s32 2, %v234
    %v236 = vrot.slane %v223, %v235
    %v237 = vlaneseq
    %v238 = vshrl.u32 %v237, 7
    %v239 = vsub.s32 3, %v238
    %v240 = vrot.slane %v223, %v239
    %v253 = vunpack.c.l.b16 %v215
    %v254 = vunpack.c.h.b16 %v215
    %v255 = vunpack.c.l.b16 %v216
    %v256 = vunpack.c.h.b16 %v216
    %v257 = vunpack.c.l.b16 %v217
    %v258 = vunpack.c.h.b16 %v217
    %v259 = vunpack.c.l.b16 %v218
    %v260 = vunpack.c.h.b16 %v218
    %v261 = vunpack.c.l.b16 %v219
    %v262 = vunpack.c.h.b16 %v219
    %v263 = vunpack.c.l.b16 %v220
    %v264 = vunpack.c.h.b16 %v220
    %v265 = vunpack.c.l.b16 %v221
    %v266 = vunpack.c.h.b16 %v221
    %v267 = vunpack.c.l.b16 %v222
    %v268 = vunpack.c.h.b16 %v222
    %v269 = vpack.c.b16 %v257, %v253
    %v270 = vpack.c.b16 %v258, %v254
    %v271 = vpack.c.b16 %v259, %v255
    %v272 = vpack.c.b16 %v260, %v256
    %v273 = vpack.c.b16 %v265, %v261
    %v274 = vpack.c.b16 %v266, %v262
    %v275 = vpack.c.b16 %v267, %v263
    %v276 = vpack.c.b16 %v268, %v264
    %v286 = vsel %vm125, %v54, 0
    %288 = vmatprep.subr.bf16.mxu0 %v270
    %289 = vmatpush1.bf16.msra.mxu0 %v269
    %290 = vmatprep.subr.bf16.mxu0 %v274
    %291 = vmatpush1.bf16.msra.mxu0 %v273
    %292 = vmatprep.subr.bf16.mxu0 0
    %293 = vmatpush1.bf16.msra.mxu0 0
    %294 = vmatprep.subr.bf16.mxu0 0
    %295 = vmatpush1.bf16.msra.mxu0 0
    %296 = vmatprep.subr.bf16.mxu0 0
    %297 = vmatpush1.bf16.msra.mxu0 0
    %298 = vmatprep.subr.bf16.mxu0 0
    %299 = vmatpush1.bf16.msra.mxu0 0
    %300 = vmatprep.subr.bf16.mxu0 0
    %301 = vmatpush1.bf16.msra.mxu0 0
    %302 = vmatprep.subr.bf16.mxu0 0
    %303 = vmatpush1.bf16.msra.mxu0 0
    %304 = vmatprep.subr.bf16.mxu0 0
    %305 = vmatpush1.bf16.msra.mxu0 0
    %306 = vmatprep.subr.bf16.mxu0 0
    %307 = vmatpush1.bf16.msra.mxu0 0
    %308 = vmatprep.subr.bf16.mxu0 0
    %309 = vmatpush1.bf16.msra.mxu0 0
    %310 = vmatprep.subr.bf16.mxu0 0
    %311 = vmatpush1.bf16.msra.mxu0 0
    %312 = vmatprep.subr.bf16.mxu0 0
    %313 = vmatpush1.bf16.msra.mxu0 0
    %314 = vmatprep.subr.bf16.mxu0 0
    %315 = vmatpush1.bf16.msra.mxu0 0
    %316 = vmatprep.subr.bf16.mxu0 0
    %317 = vmatpush1.bf16.msra.mxu0 0
    %318 = vmatprep.subr.bf16.mxu0 0
    %319 = vmatpush1.bf16.msra.mxu0 0
    %320 = vmatprep.mubr.bf16.mxu0 0
    %321 = vmatmul.mubr.bf16.gmra.mrb[0].mxu0 %v286
    %v322 = vpop.f32.mrb[0].mxu0
    %v323 = vadd.f32 %v228, %v322
    %v324 = vpop.f32.mrb[0].mxu0
    %v325 = vadd.f32 %v232, %v324
    %v326 = vpop.f32.mrb[0].mxu0
    %v327 = vadd.f32 %v228, %v326
    %v328 = vpop.f32.mrb[0].mxu0
    %v329 = vadd.f32 %v232, %v328
    %330 = vdwg.mxu0
    %331 = vmatprep.subr.bf16.mxu0 %v272
    %332 = vmatpush1.bf16.msra.mxu0 %v271
    %333 = vmatprep.subr.bf16.mxu0 %v276
    %334 = vmatpush1.bf16.msra.mxu0 %v275
    %335 = vmatprep.subr.bf16.mxu0 0
    %336 = vmatpush1.bf16.msra.mxu0 0
    %337 = vmatprep.subr.bf16.mxu0 0
    %338 = vmatpush1.bf16.msra.mxu0 0
    %339 = vmatprep.subr.bf16.mxu0 0
    %340 = vmatpush1.bf16.msra.mxu0 0
    %341 = vmatprep.subr.bf16.mxu0 0
    %342 = vmatpush1.bf16.msra.mxu0 0
    %343 = vmatprep.subr.bf16.mxu0 0
    %344 = vmatpush1.bf16.msra.mxu0 0
    %345 = vmatprep.subr.bf16.mxu0 0
    %346 = vmatpush1.bf16.msra.mxu0 0
    %347 = vmatprep.subr.bf16.mxu0 0
    %348 = vmatpush1.bf16.msra.mxu0 0
    %349 = vmatprep.subr.bf16.mxu0 0
    %350 = vmatpush1.bf16.msra.mxu0 0
    %351 = vmatprep.subr.bf16.mxu0 0
    %352 = vmatpush1.bf16.msra.mxu0 0
    %353 = vmatprep.subr.bf16.mxu0 0
    %354 = vmatpush1.bf16.msra.mxu0 0
    %355 = vmatprep.subr.bf16.mxu0 0
    %356 = vmatpush1.bf16.msra.mxu0 0
    %357 = vmatprep.subr.bf16.mxu0 0
    %358 = vmatpush1.bf16.msra.mxu0 0
    %359 = vmatprep.subr.bf16.mxu0 0
    %360 = vmatpush1.bf16.msra.mxu0 0
    %361 = vmatprep.subr.bf16.mxu0 0
    %362 = vmatpush1.bf16.msra.mxu0 0
    %363 = vmatprep.mubr.bf16.mxu0 0
    %364 = vmatmul.mubr.bf16.gmra.mrb[0].mxu0 %v286
    %v365 = vpop.f32.mrb[0].mxu0
    %v366 = vadd.f32 %v236, %v365
    %v367 = vpop.f32.mrb[0].mxu0
    %v368 = vadd.f32 %v240, %v367
    %v369 = vpop.f32.mrb[0].mxu0
    %v370 = vadd.f32 %v236, %v369
    %v371 = vpop.f32.mrb[0].mxu0
    %v372 = vadd.f32 %v240, %v371
    %373 = vdwg.mxu0
    %v374 = vld [vmem:[%s7] sm:$0xff]
    %v375 = vld [vmem:[%s7 + $0x8] sm:$0xff]
    %v376 = vld [vmem:[%s7 + $0x10] sm:$0xff]
    %v377 = vld [vmem:[%s7 + $0x18] sm:$0xff]
    %v378 = vld [vmem:[%s7 + $0x20] sm:$0xff]
    %v379 = vld [vmem:[%s7 + $0x28] sm:$0xff]
    %v380 = vld [vmem:[%s7 + $0x30] sm:$0xff]
    %v381 = vld [vmem:[%s7 + $0x38] sm:$0xff]
    %v382 = vld [vmem:[%s8] sm:$0xf]
    %v384 = vlaneseq
    %v385 = vshrl.u32 %v384, 7
    %v386 = vsub.s32 0, %v385
    %v387 = vrot.slane %v382, %v386
    %v388 = vlaneseq
    %v389 = vshrl.u32 %v388, 7
    %v390 = vsub.s32 1, %v389
    %v391 = vrot.slane %v382, %v390
    %v392 = vlaneseq
    %v393 = vshrl.u32 %v392, 7
    %v394 = vsub.s32 2, %v393
    %v395 = vrot.slane %v382, %v394
    %v396 = vlaneseq
    %v397 = vshrl.u32 %v396, 7
    %v398 = vsub.s32 3, %v397
    %v399 = vrot.slane %v382, %v398
    %v412 = vunpack.c.l.b16 %v374
    %v413 = vunpack.c.h.b16 %v374
    %v414 = vunpack.c.l.b16 %v375
    %v415 = vunpack.c.h.b16 %v375
    %v416 = vunpack.c.l.b16 %v376
    %v417 = vunpack.c.h.b16 %v376
    %v418 = vunpack.c.l.b16 %v377
    %v419 = vunpack.c.h.b16 %v377
    %v420 = vunpack.c.l.b16 %v378
    %v421 = vunpack.c.h.b16 %v378
    %v422 = vunpack.c.l.b16 %v379
    %v423 = vunpack.c.h.b16 %v379
    %v424 = vunpack.c.l.b16 %v380
    %v425 = vunpack.c.h.b16 %v380
    %v426 = vunpack.c.l.b16 %v381
    %v427 = vunpack.c.h.b16 %v381
    %v428 = vpack.c.b16 %v416, %v412
    %v429 = vpack.c.b16 %v417, %v413
    %v430 = vpack.c.b16 %v418, %v414
    %v431 = vpack.c.b16 %v419, %v415
    %v432 = vpack.c.b16 %v424, %v420
    %v433 = vpack.c.b16 %v425, %v421
    %v434 = vpack.c.b16 %v426, %v422
    %v435 = vpack.c.b16 %v427, %v423
    %444 = vmatprep.subr.bf16.mxu0 %v429
    %445 = vmatpush1.bf16.msra.mxu0 %v428
    %446 = vmatprep.subr.bf16.mxu0 %v433
    %447 = vmatpush1.bf16.msra.mxu0 %v432
    %448 = vmatprep.subr.bf16.mxu0 0
    %449 = vmatpush1.bf16.msra.mxu0 0
    %450 = vmatprep.subr.bf16.mxu0 0
    %451 = vmatpush1.bf16.msra.mxu0 0
    %452 = vmatprep.subr.bf16.mxu0 0
    %453 = vmatpush1.bf16.msra.mxu0 0
    %454 = vmatprep.subr.bf16.mxu0 0
    %455 = vmatpush1.bf16.msra.mxu0 0
    %456 = vmatprep.subr.bf16.mxu0 0
    %457 = vmatpush1.bf16.msra.mxu0 0
    %458 = vmatprep.subr.bf16.mxu0 0
    %459 = vmatpush1.bf16.msra.mxu0 0
    %460 = vmatprep.subr.bf16.mxu0 0
    %461 = vmatpush1.bf16.msra.mxu0 0
    %462 = vmatprep.subr.bf16.mxu0 0
    %463 = vmatpush1.bf16.msra.mxu0 0
    %464 = vmatprep.subr.bf16.mxu0 0
    %465 = vmatpush1.bf16.msra.mxu0 0
    %466 = vmatprep.subr.bf16.mxu0 0
    %467 = vmatpush1.bf16.msra.mxu0 0
    %468 = vmatprep.subr.bf16.mxu0 0
    %469 = vmatpush1.bf16.msra.mxu0 0
    %470 = vmatprep.subr.bf16.mxu0 0
    %471 = vmatpush1.bf16.msra.mxu0 0
    %472 = vmatprep.subr.bf16.mxu0 0
    %473 = vmatpush1.bf16.msra.mxu0 0
    %474 = vmatprep.subr.bf16.mxu0 0
    %475 = vmatpush1.bf16.msra.mxu0 0
    %476 = vmatprep.mubr.bf16.mxu0 0
    %477 = vmatmul.mubr.bf16.gmra.mrb[0].mxu0 %v286
    %v478 = vpop.f32.mrb[0].mxu0
    %v479 = vadd.f32 %v387, %v478
    %v480 = vpop.f32.mrb[0].mxu0
    %v481 = vadd.f32 %v391, %v480
    %v482 = vpop.f32.mrb[0].mxu0
    %v483 = vadd.f32 %v387, %v482
    %v484 = vpop.f32.mrb[0].mxu0
    %v485 = vadd.f32 %v391, %v484
    %486 = vdwg.mxu0
    %487 = vmatprep.subr.bf16.mxu0 %v431
    %488 = vmatpush1.bf16.msra.mxu0 %v430
    %489 = vmatprep.subr.bf16.mxu0 %v435
    %490 = vmatpush1.bf16.msra.mxu0 %v434
    %491 = vmatprep.subr.bf16.mxu0 0
    %492 = vmatpush1.bf16.msra.mxu0 0
    %493 = vmatprep.subr.bf16.mxu0 0
    %494 = vmatpush1.bf16.msra.mxu0 0
    %495 = vmatprep.subr.bf16.mxu0 0
    %496 = vmatpush1.bf16.msra.mxu0 0
    %497 = vmatprep.subr.bf16.mxu0 0
    %498 = vmatpush1.bf16.msra.mxu0 0
    %499 = vmatprep.subr.bf16.mxu0 0
    %500 = vmatpush1.bf16.msra.mxu0 0
    %501 = vmatprep.subr.bf16.mxu0 0
    %502 = vmatpush1.bf16.msra.mxu0 0
    %503 = vmatprep.subr.bf16.mxu0 0
    %504 = vmatpush1.bf16.msra.mxu0 0
    %505 = vmatprep.subr.bf16.mxu0 0
    %506 = vmatpush1.bf16.msra.mxu0 0
    %507 = vmatprep.subr.bf16.mxu0 0
    %508 = vmatpush1.bf16.msra.mxu0 0
    %509 = vmatprep.subr.bf16.mxu0 0
    %510 = vmatpush1.bf16.msra.mxu0 0
    %511 = vmatprep.subr.bf16.mxu0 0
    %512 = vmatpush1.bf16.msra.mxu0 0
    %513 = vmatprep.subr.bf16.mxu0 0
    %514 = vmatpush1.bf16.msra.mxu0 0
    %515 = vmatprep.subr.bf16.mxu0 0
    %516 = vmatpush1.bf16.msra.mxu0 0
    %517 = vmatprep.subr.bf16.mxu0 0
    %518 = vmatpush1.bf16.msra.mxu0 0
    %519 = vmatprep.mubr.bf16.mxu0 0
    %520 = vmatmul.mubr.bf16.gmra.mrb[0].mxu0 %v286
    %v521 = vpop.f32.mrb[0].mxu0
    %v522 = vadd.f32 %v395, %v521
    %v523 = vpop.f32.mrb[0].mxu0
    %v524 = vadd.f32 %v399, %v523
    %v525 = vpop.f32.mrb[0].mxu0
    %v526 = vadd.f32 %v395, %v525
    %v527 = vpop.f32.mrb[0].mxu0
    %v528 = vadd.f32 %v399, %v527
    %529 = vdwg.mxu0
    %v530 = vpack.c.bf16 %v168, %v164
    %v531 = vpack.c.bf16 %v170, %v166
    %v532 = vpack.c.bf16 %v211, %v207
    %v533 = vpack.c.bf16 %v213, %v209
    %v538 = vunpack.c.l.b16 %v530
    %v539 = vunpack.c.l.b16 %v531
    %v540 = vunpack.c.l.b16 %v532
    %v541 = vunpack.c.l.b16 %v533
    %v542 = vunpack.c.h.b16 %v530
    %v543 = vunpack.c.h.b16 %v531
    %v544 = vunpack.c.h.b16 %v532
    %v545 = vunpack.c.h.b16 %v533
    %v546 = vpack.c.b16 %v539, %v538
    %v547 = vpack.c.b16 %v541, %v540
    %v548 = vpack.c.b16 %v543, %v542
    %v549 = vpack.c.b16 %v545, %v544
    %v554 = vpack.c.bf16 %v327, %v323
    %v555 = vpack.c.bf16 %v329, %v325
    %v556 = vpack.c.bf16 %v370, %v366
    %v557 = vpack.c.bf16 %v372, %v368
    %v562 = vunpack.c.l.b16 %v554
    %v563 = vunpack.c.l.b16 %v555
    %v564 = vunpack.c.l.b16 %v556
    %v565 = vunpack.c.l.b16 %v557
    %v566 = vunpack.c.h.b16 %v554
    %v567 = vunpack.c.h.b16 %v555
    %v568 = vunpack.c.h.b16 %v556
    %v569 = vunpack.c.h.b16 %v557
    %v570 = vpack.c.b16 %v563, %v562
    %v571 = vpack.c.b16 %v565, %v564
    %v572 = vpack.c.b16 %v567, %v566
    %v573 = vpack.c.b16 %v569, %v568
    %v578 = vpack.c.bf16 %v483, %v479
    %v579 = vpack.c.bf16 %v485, %v481
    %v580 = vpack.c.bf16 %v526, %v522
    %v581 = vpack.c.bf16 %v528, %v524
    %v586 = vunpack.c.l.b16 %v578
    %v587 = vunpack.c.l.b16 %v579
    %v588 = vunpack.c.l.b16 %v580
    %v589 = vunpack.c.l.b16 %v581
    %v590 = vunpack.c.h.b16 %v578
    %v591 = vunpack.c.h.b16 %v579
    %v592 = vunpack.c.h.b16 %v580
    %v593 = vunpack.c.h.b16 %v581
    %v594 = vpack.c.b16 %v587, %v586
    %v595 = vpack.c.b16 %v589, %v588
    %v596 = vpack.c.b16 %v591, %v590
    %v597 = vpack.c.b16 %v593, %v592
    %v598 = vld [vmem:[%s2] sm:$0x1]
    %v599 = vld [vmem:[%s2 + $0x1] sm:$0x1]
    %vm600 = vcmp.eq.f32.partialorder %v598, 0.0
    %vm601 = vcmp.eq.f32.partialorder %v599, 0.0
    %v602 = vsel %vm600, -1e+30, 0.0
    %v603 = vsel %vm601, -1e+30, 0.0
    %v606 = vlaneseq
    %v607 = vshrl.u32 %v606, 7
    %v608 = vsub.s32 0, %v607
    %v609 = vrot.slane %v602, %v608
    %v610 = vlaneseq
    %v611 = vshrl.u32 %v610, 7
    %v612 = vsub.s32 0, %v611
    %v613 = vrot.slane %v603, %v612
    %616 = vmatprep.subr.bf16.mxu0 0
    %617 = vmatpush1.bf16.xpose.msra.mxu0 %v570
    %618 = vmatprep.subr.bf16.mxu0 0
    %619 = vmatpush1.bf16.xpose.msra.mxu0 0
    %620 = vmatprep.subr.bf16.mxu0 0
    %621 = vmatpush1.bf16.xpose.msra.mxu0 0
    %622 = vmatprep.subr.bf16.mxu0 0
    %623 = vmatpush1.bf16.xpose.msra.mxu0 0
    %624 = vmatprep.subr.bf16.mxu0 0
    %625 = vmatpush1.bf16.xpose.msra.mxu0 0
    %626 = vmatprep.subr.bf16.mxu0 0
    %627 = vmatpush1.bf16.xpose.msra.mxu0 0
    %628 = vmatprep.subr.bf16.mxu0 0
    %629 = vmatpush1.bf16.xpose.msra.mxu0 0
    %630 = vmatprep.subr.bf16.mxu0 0
    %631 = vmatpush1.bf16.xpose.msra.mxu0 0
    %632 = vmatprep.subr.bf16.mxu0 0
    %633 = vmatpush1.bf16.xpose.msra.mxu0 0
    %634 = vmatprep.subr.bf16.mxu0 0
    %635 = vmatpush1.bf16.xpose.msra.mxu0 0
    %636 = vmatprep.subr.bf16.mxu0 0
    %637 = vmatpush1.bf16.xpose.msra.mxu0 0
    %638 = vmatprep.subr.bf16.mxu0 0
    %639 = vmatpush1.bf16.xpose.msra.mxu0 0
    %640 = vmatprep.subr.bf16.mxu0 0
    %641 = vmatpush1.bf16.xpose.msra.mxu0 0
    %642 = vmatprep.subr.bf16.mxu0 0
    %643 = vmatpush1.bf16.xpose.msra.mxu0 0
    %644 = vmatprep.subr.bf16.mxu0 0
    %645 = vmatpush1.bf16.xpose.msra.mxu0 0
    %646 = vmatprep.subr.bf16.mxu0 0
    %647 = vmatpush1.bf16.xpose.msra.mxu0 0
    %648 = vmatprep.mubr.bf16.mxu0 0
    %649 = vmatmul.mubr.bf16.gmra.mrb[0].mxu0 %v546
    %v650 = vpop.f32.mrb[0].mxu0
    %v651 = vadd.f32 %v609, %v650
    %v652 = vpop.f32.mrb[0].mxu0
    %v653 = vpop.f32.mrb[0].mxu0
    %v654 = vpop.f32.mrb[0].mxu0
    %655 = vdwg.mxu0
    %656 = vmatprep.subr.bf16.mxu0 0
    %657 = vmatpush1.bf16.xpose.msra.mxu0 %v572
    %658 = vmatprep.subr.bf16.mxu0 0
    %659 = vmatpush1.bf16.xpose.msra.mxu0 0
    %660 = vmatprep.subr.bf16.mxu0 0
    %661 = vmatpush1.bf16.xpose.msra.mxu0 0
    %662 = vmatprep.subr.bf16.mxu0 0
    %663 = vmatpush1.bf16.xpose.msra.mxu0 0
    %664 = vmatprep.subr.bf16.mxu0 0
    %665 = vmatpush1.bf16.xpose.msra.mxu0 0
    %666 = vmatprep.subr.bf16.mxu0 0
    %667 = vmatpush1.bf16.xpose.msra.mxu0 0
    %668 = vmatprep.subr.bf16.mxu0 0
    %669 = vmatpush1.bf16.xpose.msra.mxu0 0
    %670 = vmatprep.subr.bf16.mxu0 0
    %671 = vmatpush1.bf16.xpose.msra.mxu0 0
    %672 = vmatprep.subr.bf16.mxu0 0
    %673 = vmatpush1.bf16.xpose.msra.mxu0 0
    %674 = vmatprep.subr.bf16.mxu0 0
    %675 = vmatpush1.bf16.xpose.msra.mxu0 0
    %676 = vmatprep.subr.bf16.mxu0 0
    %677 = vmatpush1.bf16.xpose.msra.mxu0 0
    %678 = vmatprep.subr.bf16.mxu0 0
    %679 = vmatpush1.bf16.xpose.msra.mxu0 0
    %680 = vmatprep.subr.bf16.mxu0 0
    %681 = vmatpush1.bf16.xpose.msra.mxu0 0
    %682 = vmatprep.subr.bf16.mxu0 0
    %683 = vmatpush1.bf16.xpose.msra.mxu0 0
    %684 = vmatprep.subr.bf16.mxu0 0
    %685 = vmatpush1.bf16.xpose.msra.mxu0 0
    %686 = vmatprep.subr.bf16.mxu0 0
    %687 = vmatpush1.bf16.xpose.msra.mxu0 0
    %688 = vmatprep.mubr.bf16.mxu0 0
    %689 = vmatmul.mubr.bf16.gmra.mrb[0].mxu0 %v548
    %v690 = vpop.f32.mrb[0].mxu0
    %v691 = vadd.f32 %v613, %v690
    %v692 = vpop.f32.mrb[0].mxu0
    %v693 = vpop.f32.mrb[0].mxu0
    %v694 = vpop.f32.mrb[0].mxu0
    %695 = vdwg.mxu0
    %vm696 = vcmask 64512
    %v697 = vsel %vm696, %v651, -inf
    %698 = vmax.xlane.f32.xlu0 %v697
    %v699 = vpop.xlane.xlu0 %698
    %v700 = vsel %vm696, %v691, -inf
    %701 = vmax.xlane.f32.xlu0 %v700
    %v702 = vpop.xlane.xlu0 %701
    %v703 = vsub.f32 %v651, %v699
    %v704 = vsub.f32 %v691, %v702
    %v705 = vmul.f32 %v703, 1.442695
    %v706 = vpow.pop %v705
    %v707 = vmul.f32 %v704, 1.442695
    %v708 = vpow.pop %v707
    %v709 = vsel %vm696, %v706, 0.0
    %710 = vadd.xlane.f32.xlu0 %v709
    %v711 = vpop.xlane.xlu0 %710
    %v712 = vsel %vm696, %v708, 0.0
    %713 = vadd.xlane.f32.xlu0 %v712
    %v714 = vpop.xlane.xlu0 %713
    %v715 = vrcp.pop %v711
    %v716 = vmul.f32 1.0, %v715
    %v717 = vrcp.pop %v714
    %v718 = vmul.f32 1.0, %v717
    %v719 = vmul.f32 %v706, %v716
    %v720 = vmul.f32 %v708, %v718
    %v721 = vpack.c.bf16 %v719, %v719
    %v722 = vpack.c.bf16 %v720, %v720
    %v725 = vsel %vm696, %v721, 0
    %v728 = vsel %vm696, %v722, 0
    %730 = vst [vmem:[#allocation4] sm:$0xf] %v725
    %731 = vst [vmem:[#allocation4 + $0x10] sm:$0xf] %v728
    %v732 = vsel %vm696, %v721, 0
    %vm734 = vcmask 1043456
    %v736 = vsel %vm734, %v594, 0
    %738 = vmatprep.subr.bf16.mxu0 0
    %739 = vmatpush1.bf16.msra.mxu0 %v736
    %740 = vmatprep.subr.bf16.mxu0 0
    %741 = vmatpush1.bf16.msra.mxu0 0
    %742 = vmatprep.subr.bf16.mxu0 0
    %743 = vmatpush1.bf16.msra.mxu0 0
    %744 = vmatprep.subr.bf16.mxu0 0
    %745 = vmatpush1.bf16.msra.mxu0 0
    %746 = vmatprep.subr.bf16.mxu0 0
    %747 = vmatpush1.bf16.msra.mxu0 0
    %748 = vmatprep.subr.bf16.mxu0 0
    %749 = vmatpush1.bf16.msra.mxu0 0
    %750 = vmatprep.subr.bf16.mxu0 0
    %751 = vmatpush1.bf16.msra.mxu0 0
    %752 = vmatprep.subr.bf16.mxu0 0
    %753 = vmatpush1.bf16.msra.mxu0 0
    %754 = vmatprep.subr.bf16.mxu0 0
    %755 = vmatpush1.bf16.msra.mxu0 0
    %756 = vmatprep.subr.bf16.mxu0 0
    %757 = vmatpush1.bf16.msra.mxu0 0
    %758 = vmatprep.subr.bf16.mxu0 0
    %759 = vmatpush1.bf16.msra.mxu0 0
    %760 = vmatprep.subr.bf16.mxu0 0
    %761 = vmatpush1.bf16.msra.mxu0 0
    %762 = vmatprep.subr.bf16.mxu0 0
    %763 = vmatpush1.bf16.msra.mxu0 0
    %764 = vmatprep.subr.bf16.mxu0 0
    %765 = vmatpush1.bf16.msra.mxu0 0
    %766 = vmatprep.subr.bf16.mxu0 0
    %767 = vmatpush1.bf16.msra.mxu0 0
    %768 = vmatprep.subr.bf16.mxu0 0
    %769 = vmatpush1.bf16.msra.mxu0 0
    %770 = vmatprep.mubr.bf16.mxu0 0
    %771 = vmatmul.mubr.bf16.gmra.mrb[0].mxu0 %v732
    %v772 = vpop.f32.mrb[0].mxu0
    %v773 = vadd.f32 0.0, %v772
    %v774 = vpop.f32.mrb[0].mxu0
    %v775 = vpop.f32.mrb[0].mxu0
    %v776 = vpop.f32.mrb[0].mxu0
    %777 = vdwg.mxu0
    %v778 = vsel %vm696, %v722, 0
    %v781 = vsel %vm734, %v596, 0
    %783 = vmatprep.subr.bf16.mxu0 0
    %784 = vmatpush1.bf16.msra.mxu0 %v781
    %785 = vmatprep.subr.bf16.mxu0 0
    %786 = vmatpush1.bf16.msra.mxu0 0
    %787 = vmatprep.subr.bf16.mxu0 0
    %788 = vmatpush1.bf16.msra.mxu0 0
    %789 = vmatprep.subr.bf16.mxu0 0
    %790 = vmatpush1.bf16.msra.mxu0 0
    %791 = vmatprep.subr.bf16.mxu0 0
    %792 = vmatpush1.bf16.msra.mxu0 0
    %793 = vmatprep.subr.bf16.mxu0 0
    %794 = vmatpush1.bf16.msra.mxu0 0
    %795 = vmatprep.subr.bf16.mxu0 0
    %796 = vmatpush1.bf16.msra.mxu0 0
    %797 = vmatprep.subr.bf16.mxu0 0
    %798 = vmatpush1.bf16.msra.mxu0 0
    %799 = vmatprep.subr.bf16.mxu0 0
    %800 = vmatpush1.bf16.msra.mxu0 0
    %801 = vmatprep.subr.bf16.mxu0 0
    %802 = vmatpush1.bf16.msra.mxu0 0
    %803 = vmatprep.subr.bf16.mxu0 0
    %804 = vmatpush1.bf16.msra.mxu0 0
    %805 = vmatprep.subr.bf16.mxu0 0
    %806 = vmatpush1.bf16.msra.mxu0 0
    %807 = vmatprep.subr.bf16.mxu0 0
    %808 = vmatpush1.bf16.msra.mxu0 0
    %809 = vmatprep.subr.bf16.mxu0 0
    %810 = vmatpush1.bf16.msra.mxu0 0
    %811 = vmatprep.subr.bf16.mxu0 0
    %812 = vmatpush1.bf16.msra.mxu0 0
    %813 = vmatprep.subr.bf16.mxu0 0
    %814 = vmatpush1.bf16.msra.mxu0 0
    %815 = vmatprep.mubr.bf16.mxu0 0
    %816 = vmatmul.mubr.bf16.gmra.mrb[0].mxu0 %v778
    %v817 = vpop.f32.mrb[0].mxu0
    %v818 = vadd.f32 0.0, %v817
    %v819 = vpop.f32.mrb[0].mxu0
    %v820 = vpop.f32.mrb[0].mxu0
    %v821 = vpop.f32.mrb[0].mxu0
    %822 = vdwg.mxu0
    %v823 = vpack.c.bf16 %v818, %v773
    %v824 = vld [vmem:[%s9] sm:$0xf]
    %v825 = vld [vmem:[%s9 + $0x4] sm:$0xf]
    %v826 = vld [vmem:[%s9 + $0x8] sm:$0xf]
    %v827 = vld [vmem:[%s9 + $0xc] sm:$0xf]
    %v828 = vld [vmem:[%s9 + $0x10] sm:$0xf]
    %v829 = vld [vmem:[%s9 + $0x14] sm:$0xf]
    %v830 = vld [vmem:[%s9 + $0x18] sm:$0xf]
    %v831 = vld [vmem:[%s9 + $0x1c] sm:$0xf]
    %v832 = vld [vmem:[%s9 + $0x20] sm:$0xf]
    %v833 = vld [vmem:[%s9 + $0x24] sm:$0xf]
    %v834 = vld [vmem:[%s9 + $0x28] sm:$0xf]
    %v835 = vld [vmem:[%s9 + $0x2c] sm:$0xf]
    %v836 = vld [vmem:[%s9 + $0x30] sm:$0xf]
    %v837 = vld [vmem:[%s9 + $0x34] sm:$0xf]
    %v838 = vld [vmem:[%s9 + $0x38] sm:$0xf]
    %v839 = vld [vmem:[%s9 + $0x3c] sm:$0xf]
    %v840 = vrot.slane %v546, 4
    %v842 = vrot.slane %v570, 4
    %844 = vmatprep.subr.bf16.mxu0 0
    %845 = vmatpush1.bf16.xpose.msra.mxu0 %v842
    %846 = vmatprep.subr.bf16.mxu0 0
    %847 = vmatpush1.bf16.xpose.msra.mxu0 0
    %848 = vmatprep.subr.bf16.mxu0 0
    %849 = vmatpush1.bf16.xpose.msra.mxu0 0
    %850 = vmatprep.subr.bf16.mxu0 0
    %851 = vmatpush1.bf16.xpose.msra.mxu0 0
    %852 = vmatprep.subr.bf16.mxu0 0
    %853 = vmatpush1.bf16.xpose.msra.mxu0 0
    %854 = vmatprep.subr.bf16.mxu0 0
    %855 = vmatpush1.bf16.xpose.msra.mxu0 0
    %856 = vmatprep.subr.bf16.mxu0 0
    %857 = vmatpush1.bf16.xpose.msra.mxu0 0
    %858 = vmatprep.subr.bf16.mxu0 0
    %859 = vmatpush1.bf16.xpose.msra.mxu0 0
    %860 = vmatprep.subr.bf16.mxu0 0
    %861 = vmatpush1.bf16.xpose.msra.mxu0 0
    %862 = vmatprep.subr.bf16.mxu0 0
    %863 = vmatpush1.bf16.xpose.msra.mxu0 0
    %864 = vmatprep.subr.bf16.mxu0 0
    %865 = vmatpush1.bf16.xpose.msra.mxu0 0
    %866 = vmatprep.subr.bf16.mxu0 0
    %867 = vmatpush1.bf16.xpose.msra.mxu0 0
    %868 = vmatprep.subr.bf16.mxu0 0
    %869 = vmatpush1.bf16.xpose.msra.mxu0 0
    %870 = vmatprep.subr.bf16.mxu0 0
    %871 = vmatpush1.bf16.xpose.msra.mxu0 0
    %872 = vmatprep.subr.bf16.mxu0 0
    %873 = vmatpush1.bf16.xpose.msra.mxu0 0
    %874 = vmatprep.subr.bf16.mxu0 0
    %875 = vmatpush1.bf16.xpose.msra.mxu0 0
    %876 = vmatprep.mubr.bf16.mxu0 0
    %877 = vmatmul.mubr.bf16.gmra.mrb[0].mxu0 %v840
    %v878 = vpop.f32.mrb[0].mxu0
    %v879 = vadd.f32 %v609, %v878
    %v880 = vpop.f32.mrb[0].mxu0
    %v881 = vpop.f32.mrb[0].mxu0
    %v882 = vpop.f32.mrb[0].mxu0
    %883 = vdwg.mxu0
    %v884 = vrot.slane %v548, 4
    %v886 = vrot.slane %v572, 4
    %888 = vmatprep.subr.bf16.mxu0 0
    %889 = vmatpush1.bf16.xpose.msra.mxu0 %v886
    %890 = vmatprep.subr.bf16.mxu0 0
    %891 = vmatpush1.bf16.xpose.msra.mxu0 0
    %892 = vmatprep.subr.bf16.mxu0 0
    %893 = vmatpush1.bf16.xpose.msra.mxu0 0
    %894 = vmatprep.subr.bf16.mxu0 0
    %895 = vmatpush1.bf16.xpose.msra.mxu0 0
    %896 = vmatprep.subr.bf16.mxu0 0
    %897 = vmatpush1.bf16.xpose.msra.mxu0 0
    %898 = vmatprep.subr.bf16.mxu0 0
    %899 = vmatpush1.bf16.xpose.msra.mxu0 0
    %900 = vmatprep.subr.bf16.mxu0 0
    %901 = vmatpush1.bf16.xpose.msra.mxu0 0
    %902 = vmatprep.subr.bf16.mxu0 0
    %903 = vmatpush1.bf16.xpose.msra.mxu0 0
    %904 = vmatprep.subr.bf16.mxu0 0
    %905 = vmatpush1.bf16.xpose.msra.mxu0 0
    %906 = vmatprep.subr.bf16.mxu0 0
    %907 = vmatpush1.bf16.xpose.msra.mxu0 0
    %908 = vmatprep.subr.bf16.mxu0 0
    %909 = vmatpush1.bf16.xpose.msra.mxu0 0
    %910 = vmatprep.subr.bf16.mxu0 0
    %911 = vmatpush1.bf16.xpose.msra.mxu0 0
    %912 = vmatprep.subr.bf16.mxu0 0
    %913 = vmatpush1.bf16.xpose.msra.mxu0 0
    %914 = vmatprep.subr.bf16.mxu0 0
    %915 = vmatpush1.bf16.xpose.msra.mxu0 0
    %916 = vmatprep.subr.bf16.mxu0 0
    %917 = vmatpush1.bf16.xpose.msra.mxu0 0
    %918 = vmatprep.subr.bf16.mxu0 0
    %919 = vmatpush1.bf16.xpose.msra.mxu0 0
    %920 = vmatprep.mubr.bf16.mxu0 0
    %921 = vmatmul.mubr.bf16.gmra.mrb[0].mxu0 %v884
    %v922 = vpop.f32.mrb[0].mxu0
    %v923 = vadd.f32 %v613, %v922
    %v924 = vpop.f32.mrb[0].mxu0
    %v925 = vpop.f32.mrb[0].mxu0
    %v926 = vpop.f32.mrb[0].mxu0
    %927 = vdwg.mxu0
    %v928 = vsel %vm696, %v879, -inf
    %929 = vmax.xlane.f32.xlu0 %v928
    %v930 = vpop.xlane.xlu0 %929
    %v931 = vsel %vm696, %v923, -inf
    %932 = vmax.xlane.f32.xlu0 %v931
    %v933 = vpop.xlane.xlu0 %932
    %v934 = vsub.f32 %v879, %v930
    %v935 = vsub.f32 %v923, %v933
    %v936 = vmul.f32 %v934, 1.442695
    %v937 = vpow.pop %v936
    %v938 = vmul.f32 %v935, 1.442695
    %v939 = vpow.pop %v938
    %v940 = vsel %vm696, %v937, 0.0
    %941 = vadd.xlane.f32.xlu0 %v940
    %v942 = vpop.xlane.xlu0 %941
    %v943 = vsel %vm696, %v939, 0.0
    %944 = vadd.xlane.f32.xlu0 %v943
    %v945 = vpop.xlane.xlu0 %944
    %v946 = vrcp.pop %v942
    %v947 = vmul.f32 1.0, %v946
    %v948 = vrcp.pop %v945
    %v949 = vmul.f32 1.0, %v948
    %v950 = vmul.f32 %v937, %v947
    %v951 = vmul.f32 %v939, %v949
    %v952 = vpack.c.bf16 %v950, %v950
    %v953 = vpack.c.bf16 %v951, %v951
    %v955 = vsel %vm696, %v952, 0
    %v958 = vsel %vm696, %v953, 0
    %s960 = scalar_lea.vmem [#allocation4], 4
    %961 = vst [vmem:[%s960] sm:$0xf] %v955
    %962 = vst [vmem:[%s960 + $0x10] sm:$0xf] %v958
    %v963 = vrot.slane %v594, 4
    %v964 = vsel %vm696, %v952, 0
    %v967 = vsel %vm734, %v963, 0
    %969 = vmatprep.subr.bf16.mxu0 0
    %970 = vmatpush1.bf16.msra.mxu0 %v967
    %971 = vmatprep.subr.bf16.mxu0 0
    %972 = vmatpush1.bf16.msra.mxu0 0
    %973 = vmatprep.subr.bf16.mxu0 0
    %974 = vmatpush1.bf16.msra.mxu0 0
    %975 = vmatprep.subr.bf16.mxu0 0
    %976 = vmatpush1.bf16.msra.mxu0 0
    %977 = vmatprep.subr.bf16.mxu0 0
    %978 = vmatpush1.bf16.msra.mxu0 0
    %979 = vmatprep.subr.bf16.mxu0 0
    %980 = vmatpush1.bf16.msra.mxu0 0
    %981 = vmatprep.subr.bf16.mxu0 0
    %982 = vmatpush1.bf16.msra.mxu0 0
    %983 = vmatprep.subr.bf16.mxu0 0
    %984 = vmatpush1.bf16.msra.mxu0 0
    %985 = vmatprep.subr.bf16.mxu0 0
    %986 = vmatpush1.bf16.msra.mxu0 0
    %987 = vmatprep.subr.bf16.mxu0 0
    %988 = vmatpush1.bf16.msra.mxu0 0
    %989 = vmatprep.subr.bf16.mxu0 0
    %990 = vmatpush1.bf16.msra.mxu0 0
    %991 = vmatprep.subr.bf16.mxu0 0
    %992 = vmatpush1.bf16.msra.mxu0 0
    %993 = vmatprep.subr.bf16.mxu0 0
    %994 = vmatpush1.bf16.msra.mxu0 0
    %995 = vmatprep.subr.bf16.mxu0 0
    %996 = vmatpush1.bf16.msra.mxu0 0
    %997 = vmatprep.subr.bf16.mxu0 0
    %998 = vmatpush1.bf16.msra.mxu0 0
    %999 = vmatprep.subr.bf16.mxu0 0
    %1000 = vmatpush1.bf16.msra.mxu0 0
    %1001 = vmatprep.mubr.bf16.mxu0 0
    %1002 = vmatmul.mubr.bf16.gmra.mrb[0].mxu0 %v964
    %v1003 = vpop.f32.mrb[0].mxu0
    %v1004 = vadd.f32 0.0, %v1003
    %v1005 = vpop.f32.mrb[0].mxu0
    %v1006 = vpop.f32.mrb[0].mxu0
    %v1007 = vpop.f32.mrb[0].mxu0
    %1008 = vdwg.mxu0
    %v1009 = vrot.slane %v596, 4
    %v1010 = vsel %vm696, %v953, 0
    %v1013 = vsel %vm734, %v1009, 0
    %1015 = vmatprep.subr.bf16.mxu0 0
    %1016 = vmatpush1.bf16.msra.mxu0 %v1013
    %1017 = vmatprep.subr.bf16.mxu0 0
    %1018 = vmatpush1.bf16.msra.mxu0 0
    %1019 = vmatprep.subr.bf16.mxu0 0
    %1020 = vmatpush1.bf16.msra.mxu0 0
    %1021 = vmatprep.subr.bf16.mxu0 0
    %1022 = vmatpush1.bf16.msra.mxu0 0
    %1023 = vmatprep.subr.bf16.mxu0 0
    %1024 = vmatpush1.bf16.msra.mxu0 0
    %1025 = vmatprep.subr.bf16.mxu0 0
    %1026 = vmatpush1.bf16.msra.mxu0 0
    %1027 = vmatprep.subr.bf16.mxu0 0
    %1028 = vmatpush1.bf16.msra.mxu0 0
    %1029 = vmatprep.subr.bf16.mxu0 0
    %1030 = vmatpush1.bf16.msra.mxu0 0
    %1031 = vmatprep.subr.bf16.mxu0 0
    %1032 = vmatpush1.bf16.msra.mxu0 0
    %1033 = vmatprep.subr.bf16.mxu0 0
    %1034 = vmatpush1.bf16.msra.mxu0 0
    %1035 = vmatprep.subr.bf16.mxu0 0
    %1036 = vmatpush1.bf16.msra.mxu0 0
    %1037 = vmatprep.subr.bf16.mxu0 0
    %1038 = vmatpush1.bf16.msra.mxu0 0
    %1039 = vmatprep.subr.bf16.mxu0 0
    %1040 = vmatpush1.bf16.msra.mxu0 0
    %1041 = vmatprep.subr.bf16.mxu0 0
    %1042 = vmatpush1.bf16.msra.mxu0 0
    %1043 = vmatprep.subr.bf16.mxu0 0
    %1044 = vmatpush1.bf16.msra.mxu0 0
    %1045 = vmatprep.subr.bf16.mxu0 0
    %1046 = vmatpush1.bf16.msra.mxu0 0
    %1047 = vmatprep.mubr.bf16.mxu0 0
    %1048 = vmatmul.mubr.bf16.gmra.mrb[0].mxu0 %v1010
    %v1049 = vpop.f32.mrb[0].mxu0
    %v1050 = vadd.f32 0.0, %v1049
    %v1051 = vpop.f32.mrb[0].mxu0
    %v1052 = vpop.f32.mrb[0].mxu0
    %v1053 = vpop.f32.mrb[0].mxu0
    %1054 = vdwg.mxu0
    %v1055 = vpack.c.bf16 %v1050, %v1004
    %v1056 = vld [vmem:[%s9 + $0x40] sm:$0xf]
    %v1057 = vld [vmem:[%s9 + $0x44] sm:$0xf]
    %v1058 = vld [vmem:[%s9 + $0x48] sm:$0xf]
    %v1059 = vld [vmem:[%s9 + $0x4c] sm:$0xf]
    %v1060 = vld [vmem:[%s9 + $0x50] sm:$0xf]
    %v1061 = vld [vmem:[%s9 + $0x54] sm:$0xf]
    %v1062 = vld [vmem:[%s9 + $0x58] sm:$0xf]
    %v1063 = vld [vmem:[%s9 + $0x5c] sm:$0xf]
    %v1064 = vld [vmem:[%s9 + $0x60] sm:$0xf]
    %v1065 = vld [vmem:[%s9 + $0x64] sm:$0xf]
    %v1066 = vld [vmem:[%s9 + $0x68] sm:$0xf]
    %v1067 = vld [vmem:[%s9 + $0x6c] sm:$0xf]
    %v1068 = vld [vmem:[%s9 + $0x70] sm:$0xf]
    %v1069 = vld [vmem:[%s9 + $0x74] sm:$0xf]
    %v1070 = vld [vmem:[%s9 + $0x78] sm:$0xf]
    %v1071 = vld [vmem:[%s9 + $0x7c] sm:$0xf]
    %v1088 = vunpack.c.l.b16 %v1056
    %v1089 = vunpack.c.l.b16 %v1057
    %v1090 = vunpack.c.l.b16 %v1058
    %v1091 = vunpack.c.l.b16 %v1059
    %v1092 = vunpack.c.l.b16 %v1060
    %v1093 = vunpack.c.l.b16 %v1061
    %v1094 = vunpack.c.l.b16 %v1062
    %v1095 = vunpack.c.l.b16 %v1063
    %v1096 = vunpack.c.l.b16 %v1064
    %v1097 = vunpack.c.l.b16 %v1065
    %v1098 = vunpack.c.l.b16 %v1066
    %v1099 = vunpack.c.l.b16 %v1067
    %v1100 = vunpack.c.l.b16 %v1068
    %v1101 = vunpack.c.l.b16 %v1069
    %v1102 = vunpack.c.l.b16 %v1070
    %v1103 = vunpack.c.l.b16 %v1071
    %v1104 = vpack.c.b16 %v1089, %v1088
    %v1105 = vpack.c.b16 %v1091, %v1090
    %v1106 = vpack.c.b16 %v1093, %v1092
    %v1107 = vpack.c.b16 %v1095, %v1094
    %v1108 = vpack.c.b16 %v1097, %v1096
    %v1109 = vpack.c.b16 %v1099, %v1098
    %v1110 = vpack.c.b16 %v1101, %v1100
    %v1111 = vpack.c.b16 %v1103, %v1102
    %1120 = vmatprep.subr.bf16.mxu0 0
    %1121 = vmatpush1.bf16.msra.mxu0 %v1104
    %1122 = vmatprep.subr.bf16.mxu0 0
    %1123 = vmatpush1.bf16.msra.mxu0 %v1105
    %1124 = vmatprep.subr.bf16.mxu0 0
    %1125 = vmatpush1.bf16.msra.mxu0 %v1106
    %1126 = vmatprep.subr.bf16.mxu0 0
    %1127 = vmatpush1.bf16.msra.mxu0 %v1107
    %1128 = vmatprep.subr.bf16.mxu0 0
    %1129 = vmatpush1.bf16.msra.mxu0 %v1108
    %1130 = vmatprep.subr.bf16.mxu0 0
    %1131 = vmatpush1.bf16.msra.mxu0 %v1109
    %1132 = vmatprep.subr.bf16.mxu0 0
    %1133 = vmatpush1.bf16.msra.mxu0 %v1110
    %1134 = vmatprep.subr.bf16.mxu0 0
    %1135 = vmatpush1.bf16.msra.mxu0 %v1111
    %1136 = vmatprep.subr.bf16.mxu0 0
    %1137 = vmatpush1.bf16.msra.mxu0 0
    %1138 = vmatprep.subr.bf16.mxu0 0
    %1139 = vmatpush1.bf16.msra.mxu0 0
    %1140 = vmatprep.subr.bf16.mxu0 0
    %1141 = vmatpush1.bf16.msra.mxu0 0
    %1142 = vmatprep.subr.bf16.mxu0 0
    %1143 = vmatpush1.bf16.msra.mxu0 0
    %1144 = vmatprep.subr.bf16.mxu0 0
    %1145 = vmatpush1.bf16.msra.mxu0 0
    %1146 = vmatprep.subr.bf16.mxu0 0
    %1147 = vmatpush1.bf16.msra.mxu0 0
    %1148 = vmatprep.subr.bf16.mxu0 0
    %1149 = vmatpush1.bf16.msra.mxu0 0
    %1150 = vmatprep.subr.bf16.mxu0 0
    %1151 = vmatpush1.bf16.msra.mxu0 0
    %1152 = vmatprep.mubr.bf16.mxu0 0
    %1153 = vmatmul.mubr.bf16.gmra.mrb[0].mxu0 %v1055
    %v1154 = vpop.f32.mrb[0].mxu0
    %v1155 = vadd.f32 0.0, %v1154
    %v1156 = vpop.f32.mrb[0].mxu0
    %v1157 = vpop.f32.mrb[0].mxu0
    %v1158 = vadd.f32 0.0, %v1157
    %v1159 = vpop.f32.mrb[0].mxu0
    %1160 = vdwg.mxu0
    %v1177 = vunpack.c.l.b16 %v824
    %v1178 = vunpack.c.l.b16 %v825
    %v1179 = vunpack.c.l.b16 %v826
    %v1180 = vunpack.c.l.b16 %v827
    %v1181 = vunpack.c.l.b16 %v828
    %v1182 = vunpack.c.l.b16 %v829
    %v1183 = vunpack.c.l.b16 %v830
    %v1184 = vunpack.c.l.b16 %v831
    %v1185 = vunpack.c.l.b16 %v832
    %v1186 = vunpack.c.l.b16 %v833
    %v1187 = vunpack.c.l.b16 %v834
    %v1188 = vunpack.c.l.b16 %v835
    %v1189 = vunpack.c.l.b16 %v836
    %v1190 = vunpack.c.l.b16 %v837
    %v1191 = vunpack.c.l.b16 %v838
    %v1192 = vunpack.c.l.b16 %v839
    %v1193 = vpack.c.b16 %v1178, %v1177
    %v1194 = vpack.c.b16 %v1180, %v1179
    %v1195 = vpack.c.b16 %v1182, %v1181
    %v1196 = vpack.c.b16 %v1184, %v1183
    %v1197 = vpack.c.b16 %v1186, %v1185
    %v1198 = vpack.c.b16 %v1188, %v1187
    %v1199 = vpack.c.b16 %v1190, %v1189
    %v1200 = vpack.c.b16 %v1192, %v1191
    %1209 = vmatprep.subr.bf16.mxu0 0
    %1210 = vmatpush1.bf16.msra.mxu0 %v1193
    %1211 = vmatprep.subr.bf16.mxu0 0
    %1212 = vmatpush1.bf16.msra.mxu0 %v1194
    %1213 = vmatprep.subr.bf16.mxu0 0
    %1214 = vmatpush1.bf16.msra.mxu0 %v1195
    %1215 = vmatprep.subr.bf16.mxu0 0
    %1216 = vmatpush1.bf16.msra.mxu0 %v1196
    %1217 = vmatprep.subr.bf16.mxu0 0
    %1218 = vmatpush1.bf16.msra.mxu0 %v1197
    %1219 = vmatprep.subr.bf16.mxu0 0
    %1220 = vmatpush1.bf16.msra.mxu0 %v1198
    %1221 = vmatprep.subr.bf16.mxu0 0
    %1222 = vmatpush1.bf16.msra.mxu0 %v1199
    %1223 = vmatprep.subr.bf16.mxu0 0
    %1224 = vmatpush1.bf16.msra.mxu0 %v1200
    %1225 = vmatprep.subr.bf16.mxu0 0
    %1226 = vmatpush1.bf16.msra.mxu0 0
    %1227 = vmatprep.subr.bf16.mxu0 0
    %1228 = vmatpush1.bf16.msra.mxu0 0
    %1229 = vmatprep.subr.bf16.mxu0 0
    %1230 = vmatpush1.bf16.msra.mxu0 0
    %1231 = vmatprep.subr.bf16.mxu0 0
    %1232 = vmatpush1.bf16.msra.mxu0 0
    %1233 = vmatprep.subr.bf16.mxu0 0
    %1234 = vmatpush1.bf16.msra.mxu0 0
    %1235 = vmatprep.subr.bf16.mxu0 0
    %1236 = vmatpush1.bf16.msra.mxu0 0
    %1237 = vmatprep.subr.bf16.mxu0 0
    %1238 = vmatpush1.bf16.msra.mxu0 0
    %1239 = vmatprep.subr.bf16.mxu0 0
    %1240 = vmatpush1.bf16.msra.mxu0 0
    %1241 = vmatprep.mubr.bf16.mxu0 0
    %1242 = vmatmul.mubr.bf16.gmra.mrb[0].mxu0 %v823
    %v1243 = vpop.f32.mrb[0].mxu0
    %v1244 = vadd.f32 %v1155, %v1243
    %v1245 = vpop.f32.mrb[0].mxu0
    %v1246 = vpop.f32.mrb[0].mxu0
    %v1247 = vadd.f32 %v1158, %v1246
    %v1248 = vpop.f32.mrb[0].mxu0
    %1249 = vdwg.mxu0
    %1250 = vmatprep.subr.bf16.mxu0 0
    %1251 = vmatpush1.bf16.xpose.msra.mxu0 %v571
    %1252 = vmatprep.subr.bf16.mxu0 0
    %1253 = vmatpush1.bf16.xpose.msra.mxu0 0
    %1254 = vmatprep.subr.bf16.mxu0 0
    %1255 = vmatpush1.bf16.xpose.msra.mxu0 0
    %1256 = vmatprep.subr.bf16.mxu0 0
    %1257 = vmatpush1.bf16.xpose.msra.mxu0 0
    %1258 = vmatprep.subr.bf16.mxu0 0
    %1259 = vmatpush1.bf16.xpose.msra.mxu0 0
    %1260 = vmatprep.subr.bf16.mxu0 0
    %1261 = vmatpush1.bf16.xpose.msra.mxu0 0
    %1262 = vmatprep.subr.bf16.mxu0 0
    %1263 = vmatpush1.bf16.xpose.msra.mxu0 0
    %1264 = vmatprep.subr.bf16.mxu0 0
    %1265 = vmatpush1.bf16.xpose.msra.mxu0 0
    %1266 = vmatprep.subr.bf16.mxu0 0
    %1267 = vmatpush1.bf16.xpose.msra.mxu0 0
    %1268 = vmatprep.subr.bf16.mxu0 0
    %1269 = vmatpush1.bf16.xpose.msra.mxu0 0
    %1270 = vmatprep.subr.bf16.mxu0 0
    %1271 = vmatpush1.bf16.xpose.msra.mxu0 0
    %1272 = vmatprep.subr.bf16.mxu0 0
    %1273 = vmatpush1.bf16.xpose.msra.mxu0 0
    %1274 = vmatprep.subr.bf16.mxu0 0
    %1275 = vmatpush1.bf16.xpose.msra.mxu0 0
    %1276 = vmatprep.subr.bf16.mxu0 0
    %1277 = vmatpush1.bf16.xpose.msra.mxu0 0
    %1278 = vmatprep.subr.bf16.mxu0 0
    %1279 = vmatpush1.bf16.xpose.msra.mxu0 0
    %1280 = vmatprep.subr.bf16.mxu0 0
    %1281 = vmatpush1.bf16.xpose.msra.mxu0 0
    %1282 = vmatprep.mubr.bf16.mxu0 0
    %1283 = vmatmul.mubr.bf16.gmra.mrb[0].mxu0 %v547
    %v1284 = vpop.f32.mrb[0].mxu0
    %v1285 = vadd.f32 %v609, %v1284
    %v1286 = vpop.f32.mrb[0].mxu0
    %v1287 = vpop.f32.mrb[0].mxu0
    %v1288 = vpop.f32.mrb[0].mxu0
    %1289 = vdwg.mxu0
    %1290 = vmatprep.subr.bf16.mxu0 0
    %1291 = vmatpush1.bf16.xpose.msra.mxu0 %v573
    %1292 = vmatprep.subr.bf16.mxu0 0
    %1293 = vmatpush1.bf16.xpose.msra.mxu0 0
    %1294 = vmatprep.subr.bf16.mxu0 0
    %1295 = vmatpush1.bf16.xpose.msra.mxu0 0
    %1296 = vmatprep.subr.bf16.mxu0 0
    %1297 = vmatpush1.bf16.xpose.msra.mxu0 0
    %1298 = vmatprep.subr.bf16.mxu0 0
    %1299 = vmatpush1.bf16.xpose.msra.mxu0 0
    %1300 = vmatprep.subr.bf16.mxu0 0
    %1301 = vmatpush1.bf16.xpose.msra.mxu0 0
    %1302 = vmatprep.subr.bf16.mxu0 0
    %1303 = vmatpush1.bf16.xpose.msra.mxu0 0
    %1304 = vmatprep.subr.bf16.mxu0 0
    %1305 = vmatpush1.bf16.xpose.msra.mxu0 0
    %1306 = vmatprep.subr.bf16.mxu0 0
    %1307 = vmatpush1.bf16.xpose.msra.mxu0 0
    %1308 = vmatprep.subr.bf16.mxu0 0
    %1309 = vmatpush1.bf16.xpose.msra.mxu0 0
    %1310 = vmatprep.subr.bf16.mxu0 0
    %1311 = vmatpush1.bf16.xpose.msra.mxu0 0
    %1312 = vmatprep.subr.bf16.mxu0 0
    %1313 = vmatpush1.bf16.xpose.msra.mxu0 0
    %1314 = vmatprep.subr.bf16.mxu0 0
    %1315 = vmatpush1.bf16.xpose.msra.mxu0 0
    %1316 = vmatprep.subr.bf16.mxu0 0
    %1317 = vmatpush1.bf16.xpose.msra.mxu0 0
    %1318 = vmatprep.subr.bf16.mxu0 0
    %1319 = vmatpush1.bf16.xpose.msra.mxu0 0
    %1320 = vmatprep.subr.bf16.mxu0 0
    %1321 = vmatpush1.bf16.xpose.msra.mxu0 0
    %1322 = vmatprep.mubr.bf16.mxu0 0
    %1323 = vmatmul.mubr.bf16.gmra.mrb[0].mxu0 %v549
    %v1324 = vpop.f32.mrb[0].mxu0
    %v1325 = vadd.f32 %v613, %v1324
    %v1326 = vpop.f32.mrb[0].mxu0
    %v1327 = vpop.f32.mrb[0].mxu0
    %v1328 = vpop.f32.mrb[0].mxu0
    %1329 = vdwg.mxu0
    %v1330 = vsel %vm696, %v1285, -inf
    %1331 = vmax.xlane.f32.xlu0 %v1330
    %v1332 = vpop.xlane.xlu0 %1331
    %v1333 = vsel %vm696, %v1325, -inf
    %1334 = vmax.xlane.f32.xlu0 %v1333
    %v1335 = vpop.xlane.xlu0 %1334
    %v1336 = vsub.f32 %v1285, %v1332
    %v1337 = vsub.f32 %v1325, %v1335
    %v1338 = vmul.f32 %v1336, 1.442695
    %v1339 = vpow.pop %v1338
    %v1340 = vmul.f32 %v1337, 1.442695
    %v1341 = vpow.pop %v1340
    %v1342 = vsel %vm696, %v1339, 0.0
    %1343 = vadd.xlane.f32.xlu0 %v1342
    %v1344 = vpop.xlane.xlu0 %1343
    %v1345 = vsel %vm696, %v1341, 0.0
    %1346 = vadd.xlane.f32.xlu0 %v1345
    %v1347 = vpop.xlane.xlu0 %1346
    %v1348 = vrcp.pop %v1344
    %v1349 = vmul.f32 1.0, %v1348
    %v1350 = vrcp.pop %v1347
    %v1351 = vmul.f32 1.0, %v1350
    %v1352 = vmul.f32 %v1339, %v1349
    %v1353 = vmul.f32 %v1341, %v1351
    %v1354 = vpack.c.bf16 %v1352, %v1352
    %v1355 = vpack.c.bf16 %v1353, %v1353
    %v1357 = vsel %vm696, %v1354, 0
    %v1360 = vsel %vm696, %v1355, 0
    %s1362 = scalar_lea.vmem [#allocation4], 8
    %1363 = vst [vmem:[%s1362] sm:$0xf] %v1357
    %1364 = vst [vmem:[%s1362 + $0x10] sm:$0xf] %v1360
    %v1365 = vsel %vm696, %v1354, 0
    %v1368 = vsel %vm734, %v595, 0
    %1370 = vmatprep.subr.bf16.mxu0 0
    %1371 = vmatpush1.bf16.msra.mxu0 %v1368
    %1372 = vmatprep.subr.bf16.mxu0 0
    %1373 = vmatpush1.bf16.msra.mxu0 0
    %1374 = vmatprep.subr.bf16.mxu0 0
    %1375 = vmatpush1.bf16.msra.mxu0 0
    %1376 = vmatprep.subr.bf16.mxu0 0
    %1377 = vmatpush1.bf16.msra.mxu0 0
    %1378 = vmatprep.subr.bf16.mxu0 0
    %1379 = vmatpush1.bf16.msra.mxu0 0
    %1380 = vmatprep.subr.bf16.mxu0 0
    %1381 = vmatpush1.bf16.msra.mxu0 0
    %1382 = vmatprep.subr.bf16.mxu0 0
    %1383 = vmatpush1.bf16.msra.mxu0 0
    %1384 = vmatprep.subr.bf16.mxu0 0
    %1385 = vmatpush1.bf16.msra.mxu0 0
    %1386 = vmatprep.subr.bf16.mxu0 0
    %1387 = vmatpush1.bf16.msra.mxu0 0
    %1388 = vmatprep.subr.bf16.mxu0 0
    %1389 = vmatpush1.bf16.msra.mxu0 0
    %1390 = vmatprep.subr.bf16.mxu0 0
    %1391 = vmatpush1.bf16.msra.mxu0 0
    %1392 = vmatprep.subr.bf16.mxu0 0
    %1393 = vmatpush1.bf16.msra.mxu0 0
    %1394 = vmatprep.subr.bf16.mxu0 0
    %1395 = vmatpush1.bf16.msra.mxu0 0
    %1396 = vmatprep.subr.bf16.mxu0 0
    %1397 = vmatpush1.bf16.msra.mxu0 0
    %1398 = vmatprep.subr.bf16.mxu0 0
    %1399 = vmatpush1.bf16.msra.mxu0 0
    %1400 = vmatprep.subr.bf16.mxu0 0
    %1401 = vmatpush1.bf16.msra.mxu0 0
    %1402 = vmatprep.mubr.bf16.mxu0 0
    %1403 = vmatmul.mubr.bf16.gmra.mrb[0].mxu0 %v1365
    %v1404 = vpop.f32.mrb[0].mxu0
    %v1405 = vadd.f32 0.0, %v1404
    %v1406 = vpop.f32.mrb[0].mxu0
    %v1407 = vpop.f32.mrb[0].mxu0
    %v1408 = vpop.f32.mrb[0].mxu0
    %1409 = vdwg.mxu0
    %v1410 = vsel %vm696, %v1355, 0
    %v1413 = vsel %vm734, %v597, 0
    %1415 = vmatprep.subr.bf16.mxu0 0
    %1416 = vmatpush1.bf16.msra.mxu0 %v1413
    %1417 = vmatprep.subr.bf16.mxu0 0
    %1418 = vmatpush1.bf16.msra.mxu0 0
    %1419 = vmatprep.subr.bf16.mxu0 0
    %1420 = vmatpush1.bf16.msra.mxu0 0
    %1421 = vmatprep.subr.bf16.mxu0 0
    %1422 = vmatpush1.bf16.msra.mxu0 0
    %1423 = vmatprep.subr.bf16.mxu0 0
    %1424 = vmatpush1.bf16.msra.mxu0 0
    %1425 = vmatprep.subr.bf16.mxu0 0
    %1426 = vmatpush1.bf16.msra.mxu0 0
    %1427 = vmatprep.subr.bf16.mxu0 0
    %1428 = vmatpush1.bf16.msra.mxu0 0
    %1429 = vmatprep.subr.bf16.mxu0 0
    %1430 = vmatpush1.bf16.msra.mxu0 0
    %1431 = vmatprep.subr.bf16.mxu0 0
    %1432 = vmatpush1.bf16.msra.mxu0 0
    %1433 = vmatprep.subr.bf16.mxu0 0
    %1434 = vmatpush1.bf16.msra.mxu0 0
    %1435 = vmatprep.subr.bf16.mxu0 0
    %1436 = vmatpush1.bf16.msra.mxu0 0
    %1437 = vmatprep.subr.bf16.mxu0 0
    %1438 = vmatpush1.bf16.msra.mxu0 0
    %1439 = vmatprep.subr.bf16.mxu0 0
    %1440 = vmatpush1.bf16.msra.mxu0 0
    %1441 = vmatprep.subr.bf16.mxu0 0
    %1442 = vmatpush1.bf16.msra.mxu0 0
    %1443 = vmatprep.subr.bf16.mxu0 0
    %1444 = vmatpush1.bf16.msra.mxu0 0
    %1445 = vmatprep.subr.bf16.mxu0 0
    %1446 = vmatpush1.bf16.msra.mxu0 0
    %1447 = vmatprep.mubr.bf16.mxu0 0
    %1448 = vmatmul.mubr.bf16.gmra.mrb[0].mxu0 %v1410
    %v1449 = vpop.f32.mrb[0].mxu0
    %v1450 = vadd.f32 0.0, %v1449
    %v1451 = vpop.f32.mrb[0].mxu0
    %v1452 = vpop.f32.mrb[0].mxu0
    %v1453 = vpop.f32.mrb[0].mxu0
    %1454 = vdwg.mxu0
    %v1455 = vpack.c.bf16 %v1450, %v1405
    %v1456 = vld [vmem:[%s9 + $0x80] sm:$0xf]
    %v1457 = vld [vmem:[%s9 + $0x84] sm:$0xf]
    %v1458 = vld [vmem:[%s9 + $0x88] sm:$0xf]
    %v1459 = vld [vmem:[%s9 + $0x8c] sm:$0xf]
    %v1460 = vld [vmem:[%s9 + $0x90] sm:$0xf]
    %v1461 = vld [vmem:[%s9 + $0x94] sm:$0xf]
    %v1462 = vld [vmem:[%s9 + $0x98] sm:$0xf]
    %v1463 = vld [vmem:[%s9 + $0x9c] sm:$0xf]
    %v1464 = vld [vmem:[%s9 + $0xa0] sm:$0xf]
    %v1465 = vld [vmem:[%s9 + $0xa4] sm:$0xf]
    %v1466 = vld [vmem:[%s9 + $0xa8] sm:$0xf]
    %v1467 = vld [vmem:[%s9 + $0xac] sm:$0xf]
    %v1468 = vld [vmem:[%s9 + $0xb0] sm:$0xf]
    %v1469 = vld [vmem:[%s9 + $0xb4] sm:$0xf]
    %v1470 = vld [vmem:[%s9 + $0xb8] sm:$0xf]
    %v1471 = vld [vmem:[%s9 + $0xbc] sm:$0xf]
    %v1488 = vunpack.c.l.b16 %v1456
    %v1489 = vunpack.c.l.b16 %v1457
    %v1490 = vunpack.c.l.b16 %v1458
    %v1491 = vunpack.c.l.b16 %v1459
    %v1492 = vunpack.c.l.b16 %v1460
    %v1493 = vunpack.c.l.b16 %v1461
    %v1494 = vunpack.c.l.b16 %v1462
    %v1495 = vunpack.c.l.b16 %v1463
    %v1496 = vunpack.c.l.b16 %v1464
    %v1497 = vunpack.c.l.b16 %v1465
    %v1498 = vunpack.c.l.b16 %v1466
    %v1499 = vunpack.c.l.b16 %v1467
    %v1500 = vunpack.c.l.b16 %v1468
    %v1501 = vunpack.c.l.b16 %v1469
    %v1502 = vunpack.c.l.b16 %v1470
    %v1503 = vunpack.c.l.b16 %v1471
    %v1504 = vpack.c.b16 %v1489, %v1488
    %v1505 = vpack.c.b16 %v1491, %v1490
    %v1506 = vpack.c.b16 %v1493, %v1492
    %v1507 = vpack.c.b16 %v1495, %v1494
    %v1508 = vpack.c.b16 %v1497, %v1496
    %v1509 = vpack.c.b16 %v1499, %v1498
    %v1510 = vpack.c.b16 %v1501, %v1500
    %v1511 = vpack.c.b16 %v1503, %v1502
    %1520 = vmatprep.subr.bf16.mxu0 0
    %1521 = vmatpush1.bf16.msra.mxu0 %v1504
    %1522 = vmatprep.subr.bf16.mxu0 0
    %1523 = vmatpush1.bf16.msra.mxu0 %v1505
    %1524 = vmatprep.subr.bf16.mxu0 0
    %1525 = vmatpush1.bf16.msra.mxu0 %v1506
    %1526 = vmatprep.subr.bf16.mxu0 0
    %1527 = vmatpush1.bf16.msra.mxu0 %v1507
    %1528 = vmatprep.subr.bf16.mxu0 0
    %1529 = vmatpush1.bf16.msra.mxu0 %v1508
    %1530 = vmatprep.subr.bf16.mxu0 0
    %1531 = vmatpush1.bf16.msra.mxu0 %v1509
    %1532 = vmatprep.subr.bf16.mxu0 0
    %1533 = vmatpush1.bf16.msra.mxu0 %v1510
    %1534 = vmatprep.subr.bf16.mxu0 0
    %1535 = vmatpush1.bf16.msra.mxu0 %v1511
    %1536 = vmatprep.subr.bf16.mxu0 0
    %1537 = vmatpush1.bf16.msra.mxu0 0
    %1538 = vmatprep.subr.bf16.mxu0 0
    %1539 = vmatpush1.bf16.msra.mxu0 0
    %1540 = vmatprep.subr.bf16.mxu0 0
    %1541 = vmatpush1.bf16.msra.mxu0 0
    %1542 = vmatprep.subr.bf16.mxu0 0
    %1543 = vmatpush1.bf16.msra.mxu0 0
    %1544 = vmatprep.subr.bf16.mxu0 0
    %1545 = vmatpush1.bf16.msra.mxu0 0
    %1546 = vmatprep.subr.bf16.mxu0 0
    %1547 = vmatpush1.bf16.msra.mxu0 0
    %1548 = vmatprep.subr.bf16.mxu0 0
    %1549 = vmatpush1.bf16.msra.mxu0 0
    %1550 = vmatprep.subr.bf16.mxu0 0
    %1551 = vmatpush1.bf16.msra.mxu0 0
    %1552 = vmatprep.mubr.bf16.mxu0 0
    %1553 = vmatmul.mubr.bf16.gmra.mrb[0].mxu0 %v1455
    %v1554 = vpop.f32.mrb[0].mxu0
    %v1555 = vadd.f32 0.0, %v1554
    %v1556 = vpop.f32.mrb[0].mxu0
    %v1557 = vpop.f32.mrb[0].mxu0
    %v1558 = vadd.f32 0.0, %v1557
    %v1559 = vpop.f32.mrb[0].mxu0
    %1560 = vdwg.mxu0
    %v1561 = vadd.f32 %v1244, %v1555
    %v1562 = vadd.f32 %v1247, %v1558
    %v1563 = vrot.slane %v547, 4
    %v1565 = vrot.slane %v571, 4
    %1567 = vmatprep.subr.bf16.mxu0 0
    %1568 = vmatpush1.bf16.xpose.msra.mxu0 %v1565
    %1569 = vmatprep.subr.bf16.mxu0 0
    %1570 = vmatpush1.bf16.xpose.msra.mxu0 0
    %1571 = vmatprep.subr.bf16.mxu0 0
    %1572 = vmatpush1.bf16.xpose.msra.mxu0 0
    %1573 = vmatprep.subr.bf16.mxu0 0
    %1574 = vmatpush1.bf16.xpose.msra.mxu0 0
    %1575 = vmatprep.subr.bf16.mxu0 0
    %1576 = vmatpush1.bf16.xpose.msra.mxu0 0
    %1577 = vmatprep.subr.bf16.mxu0 0
    %1578 = vmatpush1.bf16.xpose.msra.mxu0 0
    %1579 = vmatprep.subr.bf16.mxu0 0
    %1580 = vmatpush1.bf16.xpose.msra.mxu0 0
    %1581 = vmatprep.subr.bf16.mxu0 0
    %1582 = vmatpush1.bf16.xpose.msra.mxu0 0
    %1583 = vmatprep.subr.bf16.mxu0 0
    %1584 = vmatpush1.bf16.xpose.msra.mxu0 0
    %1585 = vmatprep.subr.bf16.mxu0 0
    %1586 = vmatpush1.bf16.xpose.msra.mxu0 0
    %1587 = vmatprep.subr.bf16.mxu0 0
    %1588 = vmatpush1.bf16.xpose.msra.mxu0 0
    %1589 = vmatprep.subr.bf16.mxu0 0
    %1590 = vmatpush1.bf16.xpose.msra.mxu0 0
    %1591 = vmatprep.subr.bf16.mxu0 0
    %1592 = vmatpush1.bf16.xpose.msra.mxu0 0
    %1593 = vmatprep.subr.bf16.mxu0 0
    %1594 = vmatpush1.bf16.xpose.msra.mxu0 0
    %1595 = vmatprep.subr.bf16.mxu0 0
    %1596 = vmatpush1.bf16.xpose.msra.mxu0 0
    %1597 = vmatprep.subr.bf16.mxu0 0
    %1598 = vmatpush1.bf16.xpose.msra.mxu0 0
    %1599 = vmatprep.mubr.bf16.mxu0 0
    %1600 = vmatmul.mubr.bf16.gmra.mrb[0].mxu0 %v1563
    %v1601 = vpop.f32.mrb[0].mxu0
    %v1602 = vadd.f32 %v609, %v1601
    %v1603 = vpop.f32.mrb[0].mxu0
    %v1604 = vpop.f32.mrb[0].mxu0
    %v1605 = vpop.f32.mrb[0].mxu0
    %1606 = vdwg.mxu0
    %v1607 = vrot.slane %v549, 4
    %v1609 = vrot.slane %v573, 4
    %1611 = vmatprep.subr.bf16.mxu0 0
    %1612 = vmatpush1.bf16.xpose.msra.mxu0 %v1609
    %1613 = vmatprep.subr.bf16.mxu0 0
    %1614 = vmatpush1.bf16.xpose.msra.mxu0 0
    %1615 = vmatprep.subr.bf16.mxu0 0
    %1616 = vmatpush1.bf16.xpose.msra.mxu0 0
    %1617 = vmatprep.subr.bf16.mxu0 0
    %1618 = vmatpush1.bf16.xpose.msra.mxu0 0
    %1619 = vmatprep.subr.bf16.mxu0 0
    %1620 = vmatpush1.bf16.xpose.msra.mxu0 0
    %1621 = vmatprep.subr.bf16.mxu0 0
    %1622 = vmatpush1.bf16.xpose.msra.mxu0 0
    %1623 = vmatprep.subr.bf16.mxu0 0
    %1624 = vmatpush1.bf16.xpose.msra.mxu0 0
    %1625 = vmatprep.subr.bf16.mxu0 0
    %1626 = vmatpush1.bf16.xpose.msra.mxu0 0
    %1627 = vmatprep.subr.bf16.mxu0 0
    %1628 = vmatpush1.bf16.xpose.msra.mxu0 0
    %1629 = vmatprep.subr.bf16.mxu0 0
    %1630 = vmatpush1.bf16.xpose.msra.mxu0 0
    %1631 = vmatprep.subr.bf16.mxu0 0
    %1632 = vmatpush1.bf16.xpose.msra.mxu0 0
    %1633 = vmatprep.subr.bf16.mxu0 0
    %1634 = vmatpush1.bf16.xpose.msra.mxu0 0
    %1635 = vmatprep.subr.bf16.mxu0 0
    %1636 = vmatpush1.bf16.xpose.msra.mxu0 0
    %1637 = vmatprep.subr.bf16.mxu0 0
    %1638 = vmatpush1.bf16.xpose.msra.mxu0 0
    %1639 = vmatprep.subr.bf16.mxu0 0
    %1640 = vmatpush1.bf16.xpose.msra.mxu0 0
    %1641 = vmatprep.subr.bf16.mxu0 0
    %1642 = vmatpush1.bf16.xpose.msra.mxu0 0
    %1643 = vmatprep.mubr.bf16.mxu0 0
    %1644 = vmatmul.mubr.bf16.gmra.mrb[0].mxu0 %v1607
    %v1645 = vpop.f32.mrb[0].mxu0
    %v1646 = vadd.f32 %v613, %v1645
    %v1647 = vpop.f32.mrb[0].mxu0
    %v1648 = vpop.f32.mrb[0].mxu0
    %v1649 = vpop.f32.mrb[0].mxu0
    %1650 = vdwg.mxu0
    %v1651 = vsel %vm696, %v1602, -inf
    %1652 = vmax.xlane.f32.xlu0 %v1651
    %v1653 = vpop.xlane.xlu0 %1652
    %v1654 = vsel %vm696, %v1646, -inf
    %1655 = vmax.xlane.f32.xlu0 %v1654
    %v1656 = vpop.xlane.xlu0 %1655
    %v1657 = vsub.f32 %v1602, %v1653
    %v1658 = vsub.f32 %v1646, %v1656
    %v1659 = vmul.f32 %v1657, 1.442695
    %v1660 = vpow.pop %v1659
    %v1661 = vmul.f32 %v1658, 1.442695
    %v1662 = vpow.pop %v1661
    %v1663 = vsel %vm696, %v1660, 0.0
    %1664 = vadd.xlane.f32.xlu0 %v1663
    %v1665 = vpop.xlane.xlu0 %1664
    %v1666 = vsel %vm696, %v1662, 0.0
    %1667 = vadd.xlane.f32.xlu0 %v1666
    %v1668 = vpop.xlane.xlu0 %1667
    %v1669 = vrcp.pop %v1665
    %v1670 = vmul.f32 1.0, %v1669
    %v1671 = vrcp.pop %v1668
    %v1672 = vmul.f32 1.0, %v1671
    %v1673 = vmul.f32 %v1660, %v1670
    %v1674 = vmul.f32 %v1662, %v1672
    %v1675 = vpack.c.bf16 %v1673, %v1673
    %v1676 = vpack.c.bf16 %v1674, %v1674
    %v1678 = vsel %vm696, %v1675, 0
    %v1681 = vsel %vm696, %v1676, 0
    %s1683 = scalar_lea.vmem [#allocation4], 12
    %1684 = vst [vmem:[%s1683] sm:$0xf] %v1678
    %1685 = vst [vmem:[%s1683 + $0x10] sm:$0xf] %v1681
    %v1686 = vrot.slane %v595, 4
    %v1687 = vsel %vm696, %v1675, 0
    %v1690 = vsel %vm734, %v1686, 0
    %1692 = vmatprep.subr.bf16.mxu0 0
    %1693 = vmatpush1.bf16.msra.mxu0 %v1690
    %1694 = vmatprep.subr.bf16.mxu0 0
    %1695 = vmatpush1.bf16.msra.mxu0 0
    %1696 = vmatprep.subr.bf16.mxu0 0
    %1697 = vmatpush1.bf16.msra.mxu0 0
    %1698 = vmatprep.subr.bf16.mxu0 0
    %1699 = vmatpush1.bf16.msra.mxu0 0
    %1700 = vmatprep.subr.bf16.mxu0 0
    %1701 = vmatpush1.bf16.msra.mxu0 0
    %1702 = vmatprep.subr.bf16.mxu0 0
    %1703 = vmatpush1.bf16.msra.mxu0 0
    %1704 = vmatprep.subr.bf16.mxu0 0
    %1705 = vmatpush1.bf16.msra.mxu0 0
    %1706 = vmatprep.subr.bf16.mxu0 0
    %1707 = vmatpush1.bf16.msra.mxu0 0
    %1708 = vmatprep.subr.bf16.mxu0 0
    %1709 = vmatpush1.bf16.msra.mxu0 0
    %1710 = vmatprep.subr.bf16.mxu0 0
    %1711 = vmatpush1.bf16.msra.mxu0 0
    %1712 = vmatprep.subr.bf16.mxu0 0
    %1713 = vmatpush1.bf16.msra.mxu0 0
    %1714 = vmatprep.subr.bf16.mxu0 0
    %1715 = vmatpush1.bf16.msra.mxu0 0
    %1716 = vmatprep.subr.bf16.mxu0 0
    %1717 = vmatpush1.bf16.msra.mxu0 0
    %1718 = vmatprep.subr.bf16.mxu0 0
    %1719 = vmatpush1.bf16.msra.mxu0 0
    %1720 = vmatprep.subr.bf16.mxu0 0
    %1721 = vmatpush1.bf16.msra.mxu0 0
    %1722 = vmatprep.subr.bf16.mxu0 0
    %1723 = vmatpush1.bf16.msra.mxu0 0
    %1724 = vmatprep.mubr.bf16.mxu0 0
    %1725 = vmatmul.mubr.bf16.gmra.mrb[0].mxu0 %v1687
    %v1726 = vpop.f32.mrb[0].mxu0
    %v1727 = vadd.f32 0.0, %v1726
    %v1728 = vpop.f32.mrb[0].mxu0
    %v1729 = vpop.f32.mrb[0].mxu0
    %v1730 = vpop.f32.mrb[0].mxu0
    %1731 = vdwg.mxu0
    %v1732 = vrot.slane %v597, 4
    %v1733 = vsel %vm696, %v1676, 0
    %v1736 = vsel %vm734, %v1732, 0
    %1738 = vmatprep.subr.bf16.mxu0 0
    %1739 = vmatpush1.bf16.msra.mxu0 %v1736
    %1740 = vmatprep.subr.bf16.mxu0 0
    %1741 = vmatpush1.bf16.msra.mxu0 0
    %1742 = vmatprep.subr.bf16.mxu0 0
    %1743 = vmatpush1.bf16.msra.mxu0 0
    %1744 = vmatprep.subr.bf16.mxu0 0
    %1745 = vmatpush1.bf16.msra.mxu0 0
    %1746 = vmatprep.subr.bf16.mxu0 0
    %1747 = vmatpush1.bf16.msra.mxu0 0
    %1748 = vmatprep.subr.bf16.mxu0 0
    %1749 = vmatpush1.bf16.msra.mxu0 0
    %1750 = vmatprep.subr.bf16.mxu0 0
    %1751 = vmatpush1.bf16.msra.mxu0 0
    %1752 = vmatprep.subr.bf16.mxu0 0
    %1753 = vmatpush1.bf16.msra.mxu0 0
    %1754 = vmatprep.subr.bf16.mxu0 0
    %1755 = vmatpush1.bf16.msra.mxu0 0
    %1756 = vmatprep.subr.bf16.mxu0 0
    %1757 = vmatpush1.bf16.msra.mxu0 0
    %1758 = vmatprep.subr.bf16.mxu0 0
    %1759 = vmatpush1.bf16.msra.mxu0 0
    %1760 = vmatprep.subr.bf16.mxu0 0
    %1761 = vmatpush1.bf16.msra.mxu0 0
    %1762 = vmatprep.subr.bf16.mxu0 0
    %1763 = vmatpush1.bf16.msra.mxu0 0
    %1764 = vmatprep.subr.bf16.mxu0 0
    %1765 = vmatpush1.bf16.msra.mxu0 0
    %1766 = vmatprep.subr.bf16.mxu0 0
    %1767 = vmatpush1.bf16.msra.mxu0 0
    %1768 = vmatprep.subr.bf16.mxu0 0
    %1769 = vmatpush1.bf16.msra.mxu0 0
    %1770 = vmatprep.mubr.bf16.mxu0 0
    %1771 = vmatmul.mubr.bf16.gmra.mrb[0].mxu0 %v1733
    %v1772 = vpop.f32.mrb[0].mxu0
    %v1773 = vadd.f32 0.0, %v1772
    %v1774 = vpop.f32.mrb[0].mxu0
    %v1775 = vpop.f32.mrb[0].mxu0
    %v1776 = vpop.f32.mrb[0].mxu0
    %1777 = vdwg.mxu0
    %v1778 = vpack.c.bf16 %v1773, %v1727
    %v1779 = vld [vmem:[%s9 + $0xc0] sm:$0xf]
    %v1780 = vld [vmem:[%s9 + $0xc4] sm:$0xf]
    %v1781 = vld [vmem:[%s9 + $0xc8] sm:$0xf]
    %v1782 = vld [vmem:[%s9 + $0xcc] sm:$0xf]
    %v1783 = vld [vmem:[%s9 + $0xd0] sm:$0xf]
    %v1784 = vld [vmem:[%s9 + $0xd4] sm:$0xf]
    %v1785 = vld [vmem:[%s9 + $0xd8] sm:$0xf]
    %v1786 = vld [vmem:[%s9 + $0xdc] sm:$0xf]
    %v1787 = vld [vmem:[%s9 + $0xe0] sm:$0xf]
    %v1788 = vld [vmem:[%s9 + $0xe4] sm:$0xf]
    %v1789 = vld [vmem:[%s9 + $0xe8] sm:$0xf]
    %v1790 = vld [vmem:[%s9 + $0xec] sm:$0xf]
    %v1791 = vld [vmem:[%s9 + $0xf0] sm:$0xf]
    %v1792 = vld [vmem:[%s9 + $0xf4] sm:$0xf]
    %v1793 = vld [vmem:[%s9 + $0xf8] sm:$0xf]
    %v1794 = vld [vmem:[%s9 + $0xfc] sm:$0xf]
    %v1811 = vunpack.c.l.b16 %v1779
    %v1812 = vunpack.c.l.b16 %v1780
    %v1813 = vunpack.c.l.b16 %v1781
    %v1814 = vunpack.c.l.b16 %v1782
    %v1815 = vunpack.c.l.b16 %v1783
    %v1816 = vunpack.c.l.b16 %v1784
    %v1817 = vunpack.c.l.b16 %v1785
    %v1818 = vunpack.c.l.b16 %v1786
    %v1819 = vunpack.c.l.b16 %v1787
    %v1820 = vunpack.c.l.b16 %v1788
    %v1821 = vunpack.c.l.b16 %v1789
    %v1822 = vunpack.c.l.b16 %v1790
    %v1823 = vunpack.c.l.b16 %v1791
    %v1824 = vunpack.c.l.b16 %v1792
    %v1825 = vunpack.c.l.b16 %v1793
    %v1826 = vunpack.c.l.b16 %v1794
    %v1827 = vpack.c.b16 %v1812, %v1811
    %v1828 = vpack.c.b16 %v1814, %v1813
    %v1829 = vpack.c.b16 %v1816, %v1815
    %v1830 = vpack.c.b16 %v1818, %v1817
    %v1831 = vpack.c.b16 %v1820, %v1819
    %v1832 = vpack.c.b16 %v1822, %v1821
    %v1833 = vpack.c.b16 %v1824, %v1823
    %v1834 = vpack.c.b16 %v1826, %v1825
    %1843 = vmatprep.subr.bf16.mxu0 0
    %1844 = vmatpush1.bf16.msra.mxu0 %v1827
    %1845 = vmatprep.subr.bf16.mxu0 0
    %1846 = vmatpush1.bf16.msra.mxu0 %v1828
    %1847 = vmatprep.subr.bf16.mxu0 0
    %1848 = vmatpush1.bf16.msra.mxu0 %v1829
    %1849 = vmatprep.subr.bf16.mxu0 0
    %1850 = vmatpush1.bf16.msra.mxu0 %v1830
    %1851 = vmatprep.subr.bf16.mxu0 0
    %1852 = vmatpush1.bf16.msra.mxu0 %v1831
    %1853 = vmatprep.subr.bf16.mxu0 0
    %1854 = vmatpush1.bf16.msra.mxu0 %v1832
    %1855 = vmatprep.subr.bf16.mxu0 0
    %1856 = vmatpush1.bf16.msra.mxu0 %v1833
    %1857 = vmatprep.subr.bf16.mxu0 0
    %1858 = vmatpush1.bf16.msra.mxu0 %v1834
    %1859 = vmatprep.subr.bf16.mxu0 0
    %1860 = vmatpush1.bf16.msra.mxu0 0
    %1861 = vmatprep.subr.bf16.mxu0 0
    %1862 = vmatpush1.bf16.msra.mxu0 0
    %1863 = vmatprep.subr.bf16.mxu0 0
    %1864 = vmatpush1.bf16.msra.mxu0 0
    %1865 = vmatprep.subr.bf16.mxu0 0
    %1866 = vmatpush1.bf16.msra.mxu0 0
    %1867 = vmatprep.subr.bf16.mxu0 0
    %1868 = vmatpush1.bf16.msra.mxu0 0
    %1869 = vmatprep.subr.bf16.mxu0 0
    %1870 = vmatpush1.bf16.msra.mxu0 0
    %1871 = vmatprep.subr.bf16.mxu0 0
    %1872 = vmatpush1.bf16.msra.mxu0 0
    %1873 = vmatprep.subr.bf16.mxu0 0
    %1874 = vmatpush1.bf16.msra.mxu0 0
    %1875 = vmatprep.mubr.bf16.mxu0 0
    %1876 = vmatmul.mubr.bf16.gmra.mrb[0].mxu0 %v1778
    %v1877 = vpop.f32.mrb[0].mxu0
    %v1878 = vadd.f32 0.0, %v1877
    %v1879 = vpop.f32.mrb[0].mxu0
    %v1880 = vpop.f32.mrb[0].mxu0
    %v1881 = vadd.f32 0.0, %v1880
    %v1882 = vpop.f32.mrb[0].mxu0
    %1883 = vdwg.mxu0
    %v1884 = vadd.f32 %v1561, %v1878
    %v1885 = vadd.f32 %v1562, %v1881
    %v1886 = vld [vmem:[%s10] sm:$0x1]
    %v1888 = vlaneseq
    %v1889 = vshrl.u32 %v1888, 7
    %v1890 = vsub.s32 0, %v1889
    %v1891 = vrot.slane %v1886, %v1890
    %v1893 = vadd.f32 %v1884, %v1891
    %v1894 = vadd.f32 %v1885, %v1891
    %v1895 = vpack.c.bf16 %v1894, %v1893
    %v1896 = vld [vmem:[%s11] sm:$0xf]
    %v1897 = vld [vmem:[%s11 + $0x4] sm:$0xf]
    %v1898 = vld [vmem:[%s11 + $0x8] sm:$0xf]
    %v1899 = vld [vmem:[%s11 + $0xc] sm:$0xf]
    %v1900 = vld [vmem:[%s12] sm:$0x1]
    %v1902 = vlaneseq
    %v1903 = vshrl.u32 %v1902, 7
    %v1904 = vsub.s32 0, %v1903
    %v1905 = vrot.slane %v1900, %v1904
    %v1911 = vunpack.c.l.b16 %v1896
    %v1912 = vunpack.c.l.b16 %v1897
    %v1913 = vunpack.c.l.b16 %v1898
    %v1914 = vunpack.c.l.b16 %v1899
    %v1915 = vpack.c.b16 %v1912, %v1911
    %v1916 = vpack.c.b16 %v1914, %v1913
    %v1920 = vsel %vm125, %v1895, 0
    %1922 = vmatprep.subr.bf16.mxu0 0
    %1923 = vmatpush1.bf16.msra.mxu0 %v1915
    %1924 = vmatprep.subr.bf16.mxu0 0
    %1925 = vmatpush1.bf16.msra.mxu0 %v1916
    %1926 = vmatprep.subr.bf16.mxu0 0
    %1927 = vmatpush1.bf16.msra.mxu0 0
    %1928 = vmatprep.subr.bf16.mxu0 0
    %1929 = vmatpush1.bf16.msra.mxu0 0
    %1930 = vmatprep.subr.bf16.mxu0 0
    %1931 = vmatpush1.bf16.msra.mxu0 0
    %1932 = vmatprep.subr.bf16.mxu0 0
    %1933 = vmatpush1.bf16.msra.mxu0 0
    %1934 = vmatprep.subr.bf16.mxu0 0
    %1935 = vmatpush1.bf16.msra.mxu0 0
    %1936 = vmatprep.subr.bf16.mxu0 0
    %1937 = vmatpush1.bf16.msra.mxu0 0
    %1938 = vmatprep.subr.bf16.mxu0 0
    %1939 = vmatpush1.bf16.msra.mxu0 0
    %1940 = vmatprep.subr.bf16.mxu0 0
    %1941 = vmatpush1.bf16.msra.mxu0 0
    %1942 = vmatprep.subr.bf16.mxu0 0
    %1943 = vmatpush1.bf16.msra.mxu0 0
    %1944 = vmatprep.subr.bf16.mxu0 0
    %1945 = vmatpush1.bf16.msra.mxu0 0
    %1946 = vmatprep.subr.bf16.mxu0 0
    %1947 = vmatpush1.bf16.msra.mxu0 0
    %1948 = vmatprep.subr.bf16.mxu0 0
    %1949 = vmatpush1.bf16.msra.mxu0 0
    %1950 = vmatprep.subr.bf16.mxu0 0
    %1951 = vmatpush1.bf16.msra.mxu0 0
    %1952 = vmatprep.subr.bf16.mxu0 0
    %1953 = vmatpush1.bf16.msra.mxu0 0
    %1954 = vmatprep.mubr.bf16.mxu0 0
    %1955 = vmatmul.mubr.bf16.gmra.mrb[0].mxu0 %v1920
    %v1956 = vpop.f32.mrb[0].mxu0
    %v1957 = vadd.f32 %v1905, %v1956
    %v1958 = vpop.f32.mrb[0].mxu0
    %v1959 = vpop.f32.mrb[0].mxu0
    %v1960 = vadd.f32 %v1905, %v1959
    %v1961 = vpop.f32.mrb[0].mxu0
    %1962 = vdwg.mxu0
    %1963 = vst [vmem:[#allocation2] sm:$0xff] %v1957
    %1964 = vst [vmem:[#allocation2 + $0x8] sm:$0xff] %v1960
    // Predicated region
    $region54: #{tpu_custom_call.1} parent=1 // pred_check
      _
    $region55: #{tpu_custom_call.1} parent=1 // pred_check_branch
      %1966 = sbr.rel (0) target = $region57
    $region56: #{tpu_custom_call.1} parent=1 // pred_region
      %s1968 = ssub.s32 256, 256
      %1969 = vsyncadd [#allocation3], %s1968
      %s1970 = sshll.u32 [#allocation2], 4
      %s1971 = int_to_ptr.vmem [resolvable:$true] %s1970
      %1976 = dma.vmem_to_hbm [thread:$0]  %s1971, 256, %s13, [#allocation3], 128, 128, 8
    $region57: #{tpu_custom_call.1} parent=1 // pred_fallthru
      _
    // Predicated region
    $region58: #{tpu_custom_call.1} parent=1 // pred_check
      _
    $region59: #{tpu_custom_call.1} parent=1 // pred_check_branch
      %1978 = sbr.rel (0) target = $region61
    $region60: #{tpu_custom_call.1} parent=1 // pred_region
      %s1980 = ssub.s32 512, 512
      %1981 = vsyncadd [#allocation5], %s1980
      %s1982 = sshll.u32 [#allocation4], 4
      %s1983 = int_to_ptr.vmem [resolvable:$true] %s1982
      %1988 = dma.vmem_to_hbm [thread:$0]  %s1983, 512, %s14, [#allocation5], 64, 64, 4
    $region61: #{tpu_custom_call.1} parent=1 // pred_fallthru
      _
    // Predicated region
    $region62: #{tpu_custom_call.1} parent=1 // pred_check
      _
    $region63: #{tpu_custom_call.1} parent=1 // pred_check_branch
      %1990 = sbr.rel (0) target = $region65
    $region64: #{tpu_custom_call.1} parent=1 // pred_region
      %1991 = dma.done [#allocation3], 256
    $region65: #{tpu_custom_call.1} parent=1 // pred_fallthru
      _
    // Predicated region
    $region66: #{tpu_custom_call.1} parent=1 // pred_check
      _
    $region67: #{tpu_custom_call.1} parent=1 // pred_check_branch
      %1993 = sbr.rel (0) target = $region69
    $region68: #{tpu_custom_call.1} parent=1 // pred_region
      %1994 = dma.done [#allocation5], 512
    $region69: #{tpu_custom_call.1} parent=1 // pred_fallthru
      _
    %1995 = vsyncpa [#allocation3], 1
    %1996 = vsyncpa [#allocation5], 1

</llo_original>
